<compile_context>
chip_gen: v7x
topology: tpu7x:2x2x1
jax: 0.10.0
libtpu: 0.0.40
codegen_flags: <defaults>
</compile_context>

<pallas_src>
import jax
import jax.numpy as jnp
from jax.experimental import pallas as pl
from jax.experimental.pallas import tpu as pltpu

K = 5
PAD = K // 2
NUM_LAYERS = 3
BN_EPS = 1e-5
LANES = 128          # channel padding target (full vreg lanes)
SUBLANES_BF16 = 16   # bf16 sublane packing granularity


def _round_up(n, m):
    return ((n + m - 1) // m) * m


def encoder_pre_kernel(x_ref, wconv_ref, scale_ref, shift_ref, wlin_ref, blin_ref,
                       out_ref, xp_ref):
    # One batch element per grid step.
    #   x_ref:     (1, T, CP)     bf16  lane-dense input (CP = round_up(C, 128))
    #   wconv_ref: (L, K, CP, CP) bf16  wconv[l, k, cin, cout]
    #   scale_ref: (L, 1, CP)     f32   gamma / sqrt(var + eps)        (BN folded)
    #   shift_ref: (L, 1, CP)     f32   (bias - mean) * scale + beta   (BN folded)
    #   wlin_ref:  (CP, CP)       bf16  linear weight, (in, out)
    #   blin_ref:  (1, CP)        f32
    #   out_ref:   (1, T, CP)     f32
    #   xp_ref:    (TP, CP)       bf16  zero-haloed activation scratch,
    #                                   TP = round_up(T + 2*PAD, 16)
    _, T, CP = x_ref.shape

    # Zero the halo + scratch once, then a single dense (128-lane, unmasked)
    # store of the input rows. Batch is handled by the grid, not Python loops.
    xp_ref[...] = jnp.zeros_like(xp_ref)
    xp_ref[PAD:PAD + T, :] = x_ref[0]

    for l in range(NUM_LAYERS):
        # Load the padded activations once; the K shifted windows are slices of
        # this value (no (T, K*C) im2col materialization, no extra VMEM copies).
        xpv = xp_ref[...]                                          # (TP, CP) bf16
        acc = jnp.dot(xpv[0:T, :], wconv_ref[l, 0],
                      preferred_element_type=jnp.float32)          # (T, CP) f32
        for k in range(1, K):
            acc = acc + jnp.dot(xpv[k:k + T, :], wconv_ref[l, k],
                                preferred_element_type=jnp.float32)
        # Conv bias + BatchNorm (inference running stats) folded affine, then ReLU.
        y = jnp.maximum(acc * scale_ref[l] + shift_ref[l], 0.0)     # f32
        # TODO(synk): F.dropout(p=0.1, self.training) modeled as identity
        # (eval-mode forward); training-mode masking would need pltpu.prng_*.
        # Write back to the bf16 scratch (PAD=2 -> packed-sublane aligned store);
        # the final Linear re-reads it so the slab's vreg live range stays bounded.
        xp_ref[PAD:PAD + T, :] = y.astype(jnp.bfloat16)

    # Final Linear + ReLU, fed from the scratch ref.
    h = xp_ref[PAD:PAD + T, :]                                      # (T, CP) bf16
    o = jnp.dot(h, wlin_ref[...], preferred_element_type=jnp.float32)
    o = jnp.maximum(o + blin_ref[...], 0.0)
    out_ref[0] = o.astype(out_ref.dtype)                            # lane-dense store


def encoder_pre(x, wconv_p, scale_p, shift_p, wlin_p, blin_p):
    """x: (B, T, C) f32; params pre-packed / zero-padded to CP lanes (see pack_params)."""
    B, T, C = x.shape
    L, Kw, CP, _ = wconv_p.shape
    TP = _round_up(T + 2 * PAD, SUBLANES_BF16)

    # Lane-dense bf16 input slab (layout plumbing; the MXU consumes bf16 anyway).
    x_p = jnp.pad(x, ((0, 0), (0, 0), (0, CP - C))).astype(jnp.bfloat16)

    flops = 2 * B * T * CP * CP * (NUM_LAYERS * K + 1)
    bytes_accessed = (x_p.size * 2 + B * T * CP * 4
                      + wconv_p.size * 2 + wlin_p.size * 2
                      + (scale_p.size + shift_p.size + blin_p.size) * 4)

    grid_spec = pltpu.PrefetchScalarGridSpec(
        num_scalar_prefetch=0,
        grid=(B,),
        in_specs=[
            pl.BlockSpec((1, T, CP), lambda b: (b, 0, 0)),           # x (per batch)
            pl.BlockSpec((L, Kw, CP, CP), lambda b: (0, 0, 0, 0)),   # conv weights
            pl.BlockSpec((L, 1, CP), lambda b: (0, 0, 0)),           # BN scale
            pl.BlockSpec((L, 1, CP), lambda b: (0, 0, 0)),           # BN shift
            pl.BlockSpec((CP, CP), lambda b: (0, 0)),                # linear weight
            pl.BlockSpec((1, CP), lambda b: (0, 0)),                 # linear bias
        ],
        out_specs=pl.BlockSpec((1, T, CP), lambda b: (b, 0, 0)),
        scratch_shapes=[pltpu.VMEM((TP, CP), jnp.bfloat16)],
    )

    out_p = pl.pallas_call(
        encoder_pre_kernel,
        out_shape=jax.ShapeDtypeStruct((B, T, CP), jnp.float32),
        grid_spec=grid_spec,
        compiler_params=pltpu.CompilerParams(
            dimension_semantics=("parallel",),
            vmem_limit_bytes=32 * 1024 * 1024),
        cost_estimate=pl.CostEstimate(flops=flops, transcendentals=0,
                                      bytes_accessed=bytes_accessed),
    )(x_p, wconv_p, scale_p, shift_p, wlin_p, blin_p)

    return out_p[:, :, :C].astype(x.dtype)


def pack_params(w_conv_torch, conv_bias, gamma, beta, rmean, rvar,
                w_linear, b_linear, cp):
    """Repack PyTorch-shaped params into the channels-last, lane-padded kernel layout."""
    L, c_out, c_in, _ = w_conv_torch.shape
    # wconv_p[l, k, cin, cout] = w_conv_torch[l, cout, cin, k], zero-padded to CP lanes.
    wconv = jnp.transpose(w_conv_torch, (0, 3, 2, 1))
    wconv_p = jnp.pad(wconv, ((0, 0), (0, 0), (0, cp - c_in), (0, cp - c_out)))
    wconv_p = wconv_p.astype(jnp.bfloat16)

    inv_std = 1.0 / jnp.sqrt(rvar + BN_EPS)
    scale = gamma * inv_std                                         # (L, C)
    shift = (conv_bias - rmean) * scale + beta                      # (L, C)
    scale_p = jnp.pad(scale, ((0, 0), (0, cp - c_out)))[:, None, :]  # (L, 1, CP) f32
    shift_p = jnp.pad(shift, ((0, 0), (0, cp - c_out)))[:, None, :]  # (L, 1, CP) f32

    wlin_p = jnp.pad(w_linear.T, ((0, cp - c_in), (0, cp - c_out))).astype(jnp.bfloat16)
    blin_p = jnp.pad(b_linear, (0, cp - c_out))[None, :]             # (1, CP) f32
    return wconv_p, scale_p, shift_p, wlin_p, blin_p


def reference(x, w_conv_torch, conv_bias, gamma, beta, rmean, rvar, wlin_t, blin):
    """Plain-JAX mirror of EncoderPre.forward (eval mode), NCT conv like PyTorch."""
    h = jnp.transpose(x, (0, 2, 1))                       # (B, C, T)
    for l in range(NUM_LAYERS):
        h = jax.lax.conv_general_dilated(
            h, w_conv_torch[l], window_strides=(1,), padding=[(PAD, PAD)],
            dimension_numbers=("NCH", "OIH", "NCH"))
        h = h + conv_bias[l][None, :, None]
        h = (h - rmean[l][None, :, None]) / jnp.sqrt(rvar[l][None, :, None] + BN_EPS)
        h = h * gamma[l][None, :, None] + beta[l][None, :, None]
        h = jnp.maximum(h, 0.0)
    h = jnp.transpose(h, (0, 2, 1))                       # (B, T, C)
    h = h @ wlin_t + blin
    return jnp.maximum(h, 0.0)


if __name__ == "__main__":
    B, T, C = 2, 8, 32                                    # batch, seq, emb_channels
    CP = _round_up(C, LANES)

    key = jax.random.PRNGKey(0)
    keys = jax.random.split(key, 10)

    # Deterministic synthetic parameters (PyTorch-shaped where relevant)
    w_conv_torch = 0.1 * jax.random.normal(keys[0], (NUM_LAYERS, C, C, K), jnp.float32)  # (L,Cout,Cin,K)
    conv_bias    = 0.1 * jax.random.normal(keys[1], (NUM_LAYERS, C), jnp.float32)
    gamma        = 1.0 + 0.1 * jax.random.normal(keys[2], (NUM_LAYERS, C), jnp.float32)
    beta         = 0.1 * jax.random.normal(keys[3], (NUM_LAYERS, C), jnp.float32)
    rmean        = 0.1 * jax.random.normal(keys[4], (NUM_LAYERS, C), jnp.float32)
    rvar         = 1.0 + 0.1 * jax.random.uniform(keys[5], (NUM_LAYERS, C), jnp.float32)
    w_linear     = 0.1 * jax.random.normal(keys[6], (C, C), jnp.float32)                 # (out, in)
    b_linear     = 0.1 * jax.random.normal(keys[7], (C,), jnp.float32)

    x = jax.random.normal(keys[8], (B, T, C), jnp.float32)

    wconv_p, scale_p, shift_p, wlin_p, blin_p = pack_params(
        w_conv_torch, conv_bias, gamma, beta, rmean, rvar, w_linear, b_linear, CP)

    out = encoder_pre(x, wconv_p, scale_p, shift_p, wlin_p, blin_p)
    out = jax.block_until_ready(out)

    ref = reference(x, w_conv_torch, conv_bias, gamma, beta, rmean, rvar,
                    w_linear.T, b_linear)
    assert out.shape == (B, T, C)
    # bf16 matmul inputs (f32 accumulation) widen the error vs the f32 reference.
    assert jnp.allclose(out, ref, atol=5e-2, rtol=5e-2), "mismatch vs reference"

    print("KERNEL_OK")
</pallas_src>

<mosaic_0001>
module attributes {stable_mosaic.version = 11 : i64} {
  func.func @encoder_pre_kernel(%arg0: i32, %arg1: memref<1x8x128xbf16, #tpu.memory_space<vmem>>, %arg2: memref<3x5x128x128xbf16, #tpu.memory_space<vmem>>, %arg3: memref<3x1x128xf32, #tpu.memory_space<vmem>>, %arg4: memref<3x1x128xf32, #tpu.memory_space<vmem>>, %arg5: memref<128x128xbf16, #tpu.memory_space<vmem>>, %arg6: memref<1x128xf32, #tpu.memory_space<vmem>>, %arg7: memref<1x8x128xf32, #tpu.memory_space<vmem>>, %arg8: memref<16x128xbf16, #tpu.memory_space<vmem>>) attributes {dimension_semantics = [#tpu.dimension_semantics<parallel>], iteration_bounds = array<i64: 2>, scalar_prefetch = 0 : i64, scratch_operands = 1 : i64, tpu.core_type = #tpu.core_type<tc>, window_params = [{transform_indices = @transform_0, window_bounds = array<i64: 1, 8, 128>}, {pipeline_mode = #tpu.pipeline_mode<synchronous>, transform_indices = @transform_1, window_bounds = array<i64: 3, 5, 128, 128>}, {pipeline_mode = #tpu.pipeline_mode<synchronous>, transform_indices = @transform_2, window_bounds = array<i64: 3, 1, 128>}, {pipeline_mode = #tpu.pipeline_mode<synchronous>, transform_indices = @transform_3, window_bounds = array<i64: 3, 1, 128>}, {pipeline_mode = #tpu.pipeline_mode<synchronous>, transform_indices = @transform_4, window_bounds = array<i64: 128, 128>}, {pipeline_mode = #tpu.pipeline_mode<synchronous>, transform_indices = @transform_5, window_bounds = array<i64: 1, 128>}, {transform_indices = @transform_6, window_bounds = array<i64: 1, 8, 128>}]} {
    %cst = arith.constant 0.000000e+00 : bf16
    %0 = vector.broadcast %cst : bf16 to vector<16x128xbf16>
    %c0 = arith.constant 0 : index
    %c0_0 = arith.constant 0 : index
    %1 = vector.load %arg8[%c0, %c0_0] : memref<16x128xbf16, #tpu.memory_space<vmem>>, vector<16x128xbf16>
    tpu.vector_store %arg8[%c0, %c0_0], %0 {strides = array<i32>} : memref<16x128xbf16, #tpu.memory_space<vmem>>, vector<16x128xbf16>,
    %c0_1 = arith.constant 0 : index
    %c0_2 = arith.constant 0 : index
    %c0_3 = arith.constant 0 : index
    %2 = vector.load %arg1[%c0_1, %c0_2, %c0_3] : memref<1x8x128xbf16, #tpu.memory_space<vmem>>, vector<1x8x128xbf16>
    %3 = vector.shape_cast %2 : vector<1x8x128xbf16> to vector<8x128xbf16>
    %c2 = arith.constant 2 : index
    %c0_4 = arith.constant 0 : index
    %4 = vector.load %arg8[%c2, %c0_4] : memref<16x128xbf16, #tpu.memory_space<vmem>>, vector<8x128xbf16>
    tpu.vector_store %arg8[%c2, %c0_4], %3 {strides = array<i32>} : memref<16x128xbf16, #tpu.memory_space<vmem>>, vector<8x128xbf16>,
    %c0_5 = arith.constant 0 : index
    %c0_6 = arith.constant 0 : index
    %5 = vector.load %arg8[%c0_5, %c0_6] : memref<16x128xbf16, #tpu.memory_space<vmem>>, vector<16x128xbf16>
    %6 = vector.extract_strided_slice %5 {offsets = [0, 0], sizes = [8, 128], strides = [1, 1]} : vector<16x128xbf16> to vector<8x128xbf16>
    %c0_7 = arith.constant 0 : index
    %c0_8 = arith.constant 0 : index
    %c0_9 = arith.constant 0 : index
    %c0_10 = arith.constant 0 : index
    %7 = vector.load %arg2[%c0_7, %c0_8, %c0_9, %c0_10] : memref<3x5x128x128xbf16, #tpu.memory_space<vmem>>, vector<1x1x128x128xbf16>
    %8 = vector.shape_cast %7 : vector<1x1x128x128xbf16> to vector<128x128xbf16>
    %cst_11 = arith.constant dense<0.000000e+00> : vector<8x128xf32>
    %9 = tpu.matmul %6, %8, %cst_11 {dimension_numbers = #tpu.dot_dimension_numbers<[1], [0], [0], [1], [0, 0, 1, 1], [], []>} : vector<8x128xbf16>, vector<128x128xbf16>, vector<8x128xf32> -> vector<8x128xf32>
    %10 = vector.extract_strided_slice %5 {offsets = [1, 0], sizes = [8, 128], strides = [1, 1]} : vector<16x128xbf16> to vector<8x128xbf16>
    %c0_12 = arith.constant 0 : index
    %c1 = arith.constant 1 : index
    %c0_13 = arith.constant 0 : index
    %c0_14 = arith.constant 0 : index
    %11 = vector.load %arg2[%c0_12, %c1, %c0_13, %c0_14] : memref<3x5x128x128xbf16, #tpu.memory_space<vmem>>, vector<1x1x128x128xbf16>
    %12 = vector.shape_cast %11 : vector<1x1x128x128xbf16> to vector<128x128xbf16>
    %cst_15 = arith.constant dense<0.000000e+00> : vector<8x128xf32>
    %13 = tpu.matmul %10, %12, %cst_15 {dimension_numbers = #tpu.dot_dimension_numbers<[1], [0], [0], [1], [0, 0, 1, 1], [], []>} : vector<8x128xbf16>, vector<128x128xbf16>, vector<8x128xf32> -> vector<8x128xf32>
    %14 = arith.addf %9, %13 : vector<8x128xf32>
    %15 = vector.extract_strided_slice %5 {offsets = [2, 0], sizes = [8, 128], strides = [1, 1]} : vector<16x128xbf16> to vector<8x128xbf16>
    %c0_16 = arith.constant 0 : index
    %c2_17 = arith.constant 2 : index
    %c0_18 = arith.constant 0 : index
    %c0_19 = arith.constant 0 : index
    %16 = vector.load %arg2[%c0_16, %c2_17, %c0_18, %c0_19] : memref<3x5x128x128xbf16, #tpu.memory_space<vmem>>, vector<1x1x128x128xbf16>
    %17 = vector.shape_cast %16 : vector<1x1x128x128xbf16> to vector<128x128xbf16>
    %cst_20 = arith.constant dense<0.000000e+00> : vector<8x128xf32>
    %18 = tpu.matmul %15, %17, %cst_20 {dimension_numbers = #tpu.dot_dimension_numbers<[1], [0], [0], [1], [0, 0, 1, 1], [], []>} : vector<8x128xbf16>, vector<128x128xbf16>, vector<8x128xf32> -> vector<8x128xf32>
    %19 = arith.addf %14, %18 : vector<8x128xf32>
    %20 = vector.extract_strided_slice %5 {offsets = [3, 0], sizes = [8, 128], strides = [1, 1]} : vector<16x128xbf16> to vector<8x128xbf16>
    %c0_21 = arith.constant 0 : index
    %c3 = arith.constant 3 : index
    %c0_22 = arith.constant 0 : index
    %c0_23 = arith.constant 0 : index
    %21 = vector.load %arg2[%c0_21, %c3, %c0_22, %c0_23] : memref<3x5x128x128xbf16, #tpu.memory_space<vmem>>, vector<1x1x128x128xbf16>
    %22 = vector.shape_cast %21 : vector<1x1x128x128xbf16> to vector<128x128xbf16>
    %cst_24 = arith.constant dense<0.000000e+00> : vector<8x128xf32>
    %23 = tpu.matmul %20, %22, %cst_24 {dimension_numbers = #tpu.dot_dimension_numbers<[1], [0], [0], [1], [0, 0, 1, 1], [], []>} : vector<8x128xbf16>, vector<128x128xbf16>, vector<8x128xf32> -> vector<8x128xf32>
    %24 = arith.addf %19, %23 : vector<8x128xf32>
    %25 = vector.extract_strided_slice %5 {offsets = [4, 0], sizes = [8, 128], strides = [1, 1]} : vector<16x128xbf16> to vector<8x128xbf16>
    %c0_25 = arith.constant 0 : index
    %c4 = arith.constant 4 : index
    %c0_26 = arith.constant 0 : index
    %c0_27 = arith.constant 0 : index
    %26 = vector.load %arg2[%c0_25, %c4, %c0_26, %c0_27] : memref<3x5x128x128xbf16, #tpu.memory_space<vmem>>, vector<1x1x128x128xbf16>
    %27 = vector.shape_cast %26 : vector<1x1x128x128xbf16> to vector<128x128xbf16>
    %cst_28 = arith.constant dense<0.000000e+00> : vector<8x128xf32>
    %28 = tpu.matmul %25, %27, %cst_28 {dimension_numbers = #tpu.dot_dimension_numbers<[1], [0], [0], [1], [0, 0, 1, 1], [], []>} : vector<8x128xbf16>, vector<128x128xbf16>, vector<8x128xf32> -> vector<8x128xf32>
    %29 = arith.addf %24, %28 : vector<8x128xf32>
    %c0_29 = arith.constant 0 : index
    %c0_30 = arith.constant 0 : index
    %c0_31 = arith.constant 0 : index
    %30 = vector.load %arg3[%c0_29, %c0_30, %c0_31] : memref<3x1x128xf32, #tpu.memory_space<vmem>>, vector<1x1x128xf32>
    %31 = vector.shape_cast %30 : vector<1x1x128xf32> to vector<1x128xf32>
    %32 = vector.broadcast %31 : vector<1x128xf32> to vector<8x128xf32>
    %33 = arith.mulf %29, %32 : vector<8x128xf32>
    %c0_32 = arith.constant 0 : index
    %c0_33 = arith.constant 0 : index
    %c0_34 = arith.constant 0 : index
    %34 = vector.load %arg4[%c0_32, %c0_33, %c0_34] : memref<3x1x128xf32, #tpu.memory_space<vmem>>, vector<1x1x128xf32>
    %35 = vector.shape_cast %34 : vector<1x1x128xf32> to vector<1x128xf32>
    %36 = vector.broadcast %35 : vector<1x128xf32> to vector<8x128xf32>
    %37 = arith.addf %33, %36 : vector<8x128xf32>
    %cst_35 = arith.constant 0.000000e+00 : f32
    %38 = vector.broadcast %cst_35 : f32 to vector<8x128xf32>
    %39 = arith.maximumf %37, %38 : vector<8x128xf32>
    %40 = arith.truncf %39 : vector<8x128xf32> to vector<8x128xbf16>
    %c2_36 = arith.constant 2 : index
    %c0_37 = arith.constant 0 : index
    %41 = vector.load %arg8[%c2_36, %c0_37] : memref<16x128xbf16, #tpu.memory_space<vmem>>, vector<8x128xbf16>
    tpu.vector_store %arg8[%c2_36, %c0_37], %40 {strides = array<i32>} : memref<16x128xbf16, #tpu.memory_space<vmem>>, vector<8x128xbf16>,
    %c0_38 = arith.constant 0 : index
    %c0_39 = arith.constant 0 : index
    %42 = vector.load %arg8[%c0_38, %c0_39] : memref<16x128xbf16, #tpu.memory_space<vmem>>, vector<16x128xbf16>
    %43 = vector.extract_strided_slice %42 {offsets = [0, 0], sizes = [8, 128], strides = [1, 1]} : vector<16x128xbf16> to vector<8x128xbf16>
    %c1_40 = arith.constant 1 : index
    %c0_41 = arith.constant 0 : index
    %c0_42 = arith.constant 0 : index
    %c0_43 = arith.constant 0 : index
    %44 = vector.load %arg2[%c1_40, %c0_41, %c0_42, %c0_43] : memref<3x5x128x128xbf16, #tpu.memory_space<vmem>>, vector<1x1x128x128xbf16>
    %45 = vector.shape_cast %44 : vector<1x1x128x128xbf16> to vector<128x128xbf16>
    %cst_44 = arith.constant dense<0.000000e+00> : vector<8x128xf32>
    %46 = tpu.matmul %43, %45, %cst_44 {dimension_numbers = #tpu.dot_dimension_numbers<[1], [0], [0], [1], [0, 0, 1, 1], [], []>} : vector<8x128xbf16>, vector<128x128xbf16>, vector<8x128xf32> -> vector<8x128xf32>
    %47 = vector.extract_strided_slice %42 {offsets = [1, 0], sizes = [8, 128], strides = [1, 1]} : vector<16x128xbf16> to vector<8x128xbf16>
    %c1_45 = arith.constant 1 : index
    %c1_46 = arith.constant 1 : index
    %c0_47 = arith.constant 0 : index
    %c0_48 = arith.constant 0 : index
    %48 = vector.load %arg2[%c1_45, %c1_46, %c0_47, %c0_48] : memref<3x5x128x128xbf16, #tpu.memory_space<vmem>>, vector<1x1x128x128xbf16>
    %49 = vector.shape_cast %48 : vector<1x1x128x128xbf16> to vector<128x128xbf16>
    %cst_49 = arith.constant dense<0.000000e+00> : vector<8x128xf32>
    %50 = tpu.matmul %47, %49, %cst_49 {dimension_numbers = #tpu.dot_dimension_numbers<[1], [0], [0], [1], [0, 0, 1, 1], [], []>} : vector<8x128xbf16>, vector<128x128xbf16>, vector<8x128xf32> -> vector<8x128xf32>
    %51 = arith.addf %46, %50 : vector<8x128xf32>
    %52 = vector.extract_strided_slice %42 {offsets = [2, 0], sizes = [8, 128], strides = [1, 1]} : vector<16x128xbf16> to vector<8x128xbf16>
    %c1_50 = arith.constant 1 : index
    %c2_51 = arith.constant 2 : index
    %c0_52 = arith.constant 0 : index
    %c0_53 = arith.constant 0 : index
    %53 = vector.load %arg2[%c1_50, %c2_51, %c0_52, %c0_53] : memref<3x5x128x128xbf16, #tpu.memory_space<vmem>>, vector<1x1x128x128xbf16>
    %54 = vector.shape_cast %53 : vector<1x1x128x128xbf16> to vector<128x128xbf16>
    %cst_54 = arith.constant dense<0.000000e+00> : vector<8x128xf32>
    %55 = tpu.matmul %52, %54, %cst_54 {dimension_numbers = #tpu.dot_dimension_numbers<[1], [0], [0], [1], [0, 0, 1, 1], [], []>} : vector<8x128xbf16>, vector<128x128xbf16>, vector<8x128xf32> -> vector<8x128xf32>
    %56 = arith.addf %51, %55 : vector<8x128xf32>
    %57 = vector.extract_strided_slice %42 {offsets = [3, 0], sizes = [8, 128], strides = [1, 1]} : vector<16x128xbf16> to vector<8x128xbf16>
    %c1_55 = arith.constant 1 : index
    %c3_56 = arith.constant 3 : index
    %c0_57 = arith.constant 0 : index
    %c0_58 = arith.constant 0 : index
    %58 = vector.load %arg2[%c1_55, %c3_56, %c0_57, %c0_58] : memref<3x5x128x128xbf16, #tpu.memory_space<vmem>>, vector<1x1x128x128xbf16>
    %59 = vector.shape_cast %58 : vector<1x1x128x128xbf16> to vector<128x128xbf16>
    %cst_59 = arith.constant dense<0.000000e+00> : vector<8x128xf32>
    %60 = tpu.matmul %57, %59, %cst_59 {dimension_numbers = #tpu.dot_dimension_numbers<[1], [0], [0], [1], [0, 0, 1, 1], [], []>} : vector<8x128xbf16>, vector<128x128xbf16>, vector<8x128xf32> -> vector<8x128xf32>
    %61 = arith.addf %56, %60 : vector<8x128xf32>
    %62 = vector.extract_strided_slice %42 {offsets = [4, 0], sizes = [8, 128], strides = [1, 1]} : vector<16x128xbf16> to vector<8x128xbf16>
    %c1_60 = arith.constant 1 : index
    %c4_61 = arith.constant 4 : index
    %c0_62 = arith.constant 0 : index
    %c0_63 = arith.constant 0 : index
    %63 = vector.load %arg2[%c1_60, %c4_61, %c0_62, %c0_63] : memref<3x5x128x128xbf16, #tpu.memory_space<vmem>>, vector<1x1x128x128xbf16>
    %64 = vector.shape_cast %63 : vector<1x1x128x128xbf16> to vector<128x128xbf16>
    %cst_64 = arith.constant dense<0.000000e+00> : vector<8x128xf32>
    %65 = tpu.matmul %62, %64, %cst_64 {dimension_numbers = #tpu.dot_dimension_numbers<[1], [0], [0], [1], [0, 0, 1, 1], [], []>} : vector<8x128xbf16>, vector<128x128xbf16>, vector<8x128xf32> -> vector<8x128xf32>
    %66 = arith.addf %61, %65 : vector<8x128xf32>
    %c1_65 = arith.constant 1 : index
    %c0_66 = arith.constant 0 : index
    %c0_67 = arith.constant 0 : index
    %67 = vector.load %arg3[%c1_65, %c0_66, %c0_67] : memref<3x1x128xf32, #tpu.memory_space<vmem>>, vector<1x1x128xf32>
    %68 = vector.shape_cast %67 : vector<1x1x128xf32> to vector<1x128xf32>
    %69 = vector.broadcast %68 : vector<1x128xf32> to vector<8x128xf32>
    %70 = arith.mulf %66, %69 : vector<8x128xf32>
    %c1_68 = arith.constant 1 : index
    %c0_69 = arith.constant 0 : index
    %c0_70 = arith.constant 0 : index
    %71 = vector.load %arg4[%c1_68, %c0_69, %c0_70] : memref<3x1x128xf32, #tpu.memory_space<vmem>>, vector<1x1x128xf32>
    %72 = vector.shape_cast %71 : vector<1x1x128xf32> to vector<1x128xf32>
    %73 = vector.broadcast %72 : vector<1x128xf32> to vector<8x128xf32>
    %74 = arith.addf %70, %73 : vector<8x128xf32>
    %cst_71 = arith.constant 0.000000e+00 : f32
    %75 = vector.broadcast %cst_71 : f32 to vector<8x128xf32>
    %76 = arith.maximumf %74, %75 : vector<8x128xf32>
    %77 = arith.truncf %76 : vector<8x128xf32> to vector<8x128xbf16>
    %c2_72 = arith.constant 2 : index
    %c0_73 = arith.constant 0 : index
    %78 = vector.load %arg8[%c2_72, %c0_73] : memref<16x128xbf16, #tpu.memory_space<vmem>>, vector<8x128xbf16>
    tpu.vector_store %arg8[%c2_72, %c0_73], %77 {strides = array<i32>} : memref<16x128xbf16, #tpu.memory_space<vmem>>, vector<8x128xbf16>,
    %c0_74 = arith.constant 0 : index
    %c0_75 = arith.constant 0 : index
    %79 = vector.load %arg8[%c0_74, %c0_75] : memref<16x128xbf16, #tpu.memory_space<vmem>>, vector<16x128xbf16>
    %80 = vector.extract_strided_slice %79 {offsets = [0, 0], sizes = [8, 128], strides = [1, 1]} : vector<16x128xbf16> to vector<8x128xbf16>
    %c2_76 = arith.constant 2 : index
    %c0_77 = arith.constant 0 : index
    %c0_78 = arith.constant 0 : index
    %c0_79 = arith.constant 0 : index
    %81 = vector.load %arg2[%c2_76, %c0_77, %c0_78, %c0_79] : memref<3x5x128x128xbf16, #tpu.memory_space<vmem>>, vector<1x1x128x128xbf16>
    %82 = vector.shape_cast %81 : vector<1x1x128x128xbf16> to vector<128x128xbf16>
    %cst_80 = arith.constant dense<0.000000e+00> : vector<8x128xf32>
    %83 = tpu.matmul %80, %82, %cst_80 {dimension_numbers = #tpu.dot_dimension_numbers<[1], [0], [0], [1], [0, 0, 1, 1], [], []>} : vector<8x128xbf16>, vector<128x128xbf16>, vector<8x128xf32> -> vector<8x128xf32>
    %84 = vector.extract_strided_slice %79 {offsets = [1, 0], sizes = [8, 128], strides = [1, 1]} : vector<16x128xbf16> to vector<8x128xbf16>
    %c2_81 = arith.constant 2 : index
    %c1_82 = arith.constant 1 : index
    %c0_83 = arith.constant 0 : index
    %c0_84 = arith.constant 0 : index
    %85 = vector.load %arg2[%c2_81, %c1_82, %c0_83, %c0_84] : memref<3x5x128x128xbf16, #tpu.memory_space<vmem>>, vector<1x1x128x128xbf16>
    %86 = vector.shape_cast %85 : vector<1x1x128x128xbf16> to vector<128x128xbf16>
    %cst_85 = arith.constant dense<0.000000e+00> : vector<8x128xf32>
    %87 = tpu.matmul %84, %86, %cst_85 {dimension_numbers = #tpu.dot_dimension_numbers<[1], [0], [0], [1], [0, 0, 1, 1], [], []>} : vector<8x128xbf16>, vector<128x128xbf16>, vector<8x128xf32> -> vector<8x128xf32>
    %88 = arith.addf %83, %87 : vector<8x128xf32>
    %89 = vector.extract_strided_slice %79 {offsets = [2, 0], sizes = [8, 128], strides = [1, 1]} : vector<16x128xbf16> to vector<8x128xbf16>
    %c2_86 = arith.constant 2 : index
    %c2_87 = arith.constant 2 : index
    %c0_88 = arith.constant 0 : index
    %c0_89 = arith.constant 0 : index
    %90 = vector.load %arg2[%c2_86, %c2_87, %c0_88, %c0_89] : memref<3x5x128x128xbf16, #tpu.memory_space<vmem>>, vector<1x1x128x128xbf16>
    %91 = vector.shape_cast %90 : vector<1x1x128x128xbf16> to vector<128x128xbf16>
    %cst_90 = arith.constant dense<0.000000e+00> : vector<8x128xf32>
    %92 = tpu.matmul %89, %91, %cst_90 {dimension_numbers = #tpu.dot_dimension_numbers<[1], [0], [0], [1], [0, 0, 1, 1], [], []>} : vector<8x128xbf16>, vector<128x128xbf16>, vector<8x128xf32> -> vector<8x128xf32>
    %93 = arith.addf %88, %92 : vector<8x128xf32>
    %94 = vector.extract_strided_slice %79 {offsets = [3, 0], sizes = [8, 128], strides = [1, 1]} : vector<16x128xbf16> to vector<8x128xbf16>
    %c2_91 = arith.constant 2 : index
    %c3_92 = arith.constant 3 : index
    %c0_93 = arith.constant 0 : index
    %c0_94 = arith.constant 0 : index
    %95 = vector.load %arg2[%c2_91, %c3_92, %c0_93, %c0_94] : memref<3x5x128x128xbf16, #tpu.memory_space<vmem>>, vector<1x1x128x128xbf16>
    %96 = vector.shape_cast %95 : vector<1x1x128x128xbf16> to vector<128x128xbf16>
    %cst_95 = arith.constant dense<0.000000e+00> : vector<8x128xf32>
    %97 = tpu.matmul %94, %96, %cst_95 {dimension_numbers = #tpu.dot_dimension_numbers<[1], [0], [0], [1], [0, 0, 1, 1], [], []>} : vector<8x128xbf16>, vector<128x128xbf16>, vector<8x128xf32> -> vector<8x128xf32>
    %98 = arith.addf %93, %97 : vector<8x128xf32>
    %99 = vector.extract_strided_slice %79 {offsets = [4, 0], sizes = [8, 128], strides = [1, 1]} : vector<16x128xbf16> to vector<8x128xbf16>
    %c2_96 = arith.constant 2 : index
    %c4_97 = arith.constant 4 : index
    %c0_98 = arith.constant 0 : index
    %c0_99 = arith.constant 0 : index
    %100 = vector.load %arg2[%c2_96, %c4_97, %c0_98, %c0_99] : memref<3x5x128x128xbf16, #tpu.memory_space<vmem>>, vector<1x1x128x128xbf16>
    %101 = vector.shape_cast %100 : vector<1x1x128x128xbf16> to vector<128x128xbf16>
    %cst_100 = arith.constant dense<0.000000e+00> : vector<8x128xf32>
    %102 = tpu.matmul %99, %101, %cst_100 {dimension_numbers = #tpu.dot_dimension_numbers<[1], [0], [0], [1], [0, 0, 1, 1], [], []>} : vector<8x128xbf16>, vector<128x128xbf16>, vector<8x128xf32> -> vector<8x128xf32>
    %103 = arith.addf %98, %102 : vector<8x128xf32>
    %c2_101 = arith.constant 2 : index
    %c0_102 = arith.constant 0 : index
    %c0_103 = arith.constant 0 : index
    %104 = vector.load %arg3[%c2_101, %c0_102, %c0_103] : memref<3x1x128xf32, #tpu.memory_space<vmem>>, vector<1x1x128xf32>
    %105 = vector.shape_cast %104 : vector<1x1x128xf32> to vector<1x128xf32>
    %106 = vector.broadcast %105 : vector<1x128xf32> to vector<8x128xf32>
    %107 = arith.mulf %103, %106 : vector<8x128xf32>
    %c2_104 = arith.constant 2 : index
    %c0_105 = arith.constant 0 : index
    %c0_106 = arith.constant 0 : index
    %108 = vector.load %arg4[%c2_104, %c0_105, %c0_106] : memref<3x1x128xf32, #tpu.memory_space<vmem>>, vector<1x1x128xf32>
    %109 = vector.shape_cast %108 : vector<1x1x128xf32> to vector<1x128xf32>
    %110 = vector.broadcast %109 : vector<1x128xf32> to vector<8x128xf32>
    %111 = arith.addf %107, %110 : vector<8x128xf32>
    %cst_107 = arith.constant 0.000000e+00 : f32
    %112 = vector.broadcast %cst_107 : f32 to vector<8x128xf32>
    %113 = arith.maximumf %111, %112 : vector<8x128xf32>
    %114 = arith.truncf %113 : vector<8x128xf32> to vector<8x128xbf16>
    %c2_108 = arith.constant 2 : index
    %c0_109 = arith.constant 0 : index
    %115 = vector.load %arg8[%c2_108, %c0_109] : memref<16x128xbf16, #tpu.memory_space<vmem>>, vector<8x128xbf16>
    tpu.vector_store %arg8[%c2_108, %c0_109], %114 {strides = array<i32>} : memref<16x128xbf16, #tpu.memory_space<vmem>>, vector<8x128xbf16>,
    %c2_110 = arith.constant 2 : index
    %c0_111 = arith.constant 0 : index
    %116 = vector.load %arg8[%c2_110, %c0_111] : memref<16x128xbf16, #tpu.memory_space<vmem>>, vector<8x128xbf16>
    %c0_112 = arith.constant 0 : index
    %c0_113 = arith.constant 0 : index
    %117 = vector.load %arg5[%c0_112, %c0_113] : memref<128x128xbf16, #tpu.memory_space<vmem>>, vector<128x128xbf16>
    %cst_114 = arith.constant dense<0.000000e+00> : vector<8x128xf32>
    %118 = tpu.matmul %116, %117, %cst_114 {dimension_numbers = #tpu.dot_dimension_numbers<[1], [0], [0], [1], [0, 0, 1, 1], [], []>} : vector<8x128xbf16>, vector<128x128xbf16>, vector<8x128xf32> -> vector<8x128xf32>
    %c0_115 = arith.constant 0 : index
    %c0_116 = arith.constant 0 : index
    %119 = vector.load %arg6[%c0_115, %c0_116] : memref<1x128xf32, #tpu.memory_space<vmem>>, vector<1x128xf32>
    %120 = vector.broadcast %119 : vector<1x128xf32> to vector<8x128xf32>
    %121 = arith.addf %118, %120 : vector<8x128xf32>
    %cst_117 = arith.constant 0.000000e+00 : f32
    %122 = vector.broadcast %cst_117 : f32 to vector<8x128xf32>
    %123 = arith.maximumf %121, %122 : vector<8x128xf32>
    %c0_118 = arith.constant 0 : index
    %c0_119 = arith.constant 0 : index
    %c0_120 = arith.constant 0 : index
    %124 = vector.load %arg7[%c0_118, %c0_119, %c0_120] : memref<1x8x128xf32, #tpu.memory_space<vmem>>, vector<1x8x128xf32>
    %125 = vector.shape_cast %124 : vector<1x8x128xf32> to vector<8x128xf32>
    %126 = vector.shape_cast %123 : vector<8x128xf32> to vector<1x8x128xf32>
    tpu.vector_store %arg7[%c0_118, %c0_119, %c0_120], %126 {strides = array<i32>} : memref<1x8x128xf32, #tpu.memory_space<vmem>>, vector<1x8x128xf32>,
    return
  }
  func.func @transform_0(%arg0: i32) -> (i32, i32, i32) {
    %c0_i32 = arith.constant 0 : i32
    %c0_i32_0 = arith.constant 0 : i32
    %c0_i32_1 = arith.constant 0 : i32
    return %arg0, %c0_i32, %c0_i32_0 : i32, i32, i32
  }
  func.func @transform_1(%arg0: i32) -> (i32, i32, i32, i32) {
    %c0_i32 = arith.constant 0 : i32
    %c0_i32_0 = arith.constant 0 : i32
    %c0_i32_1 = arith.constant 0 : i32
    %c0_i32_2 = arith.constant 0 : i32
    %c0_i32_3 = arith.constant 0 : i32
    return %c0_i32, %c0_i32_0, %c0_i32_1, %c0_i32_2 : i32, i32, i32, i32
  }
  func.func @transform_2(%arg0: i32) -> (i32, i32, i32) {
    %c0_i32 = arith.constant 0 : i32
    %c0_i32_0 = arith.constant 0 : i32
    %c0_i32_1 = arith.constant 0 : i32
    %c0_i32_2 = arith.constant 0 : i32
    return %c0_i32, %c0_i32_0, %c0_i32_1 : i32, i32, i32
  }
  func.func @transform_3(%arg0: i32) -> (i32, i32, i32) {
    %c0_i32 = arith.constant 0 : i32
    %c0_i32_0 = arith.constant 0 : i32
    %c0_i32_1 = arith.constant 0 : i32
    %c0_i32_2 = arith.constant 0 : i32
    return %c0_i32, %c0_i32_0, %c0_i32_1 : i32, i32, i32
  }
  func.func @transform_4(%arg0: i32) -> (i32, i32) {
    %c0_i32 = arith.constant 0 : i32
    %c0_i32_0 = arith.constant 0 : i32
    %c0_i32_1 = arith.constant 0 : i32
    return %c0_i32, %c0_i32_0 : i32, i32
  }
  func.func @transform_5(%arg0: i32) -> (i32, i32) {
    %c0_i32 = arith.constant 0 : i32
    %c0_i32_0 = arith.constant 0 : i32
    %c0_i32_1 = arith.constant 0 : i32
    return %c0_i32, %c0_i32_0 : i32, i32
  }
  func.func @transform_6(%arg0: i32) -> (i32, i32, i32) {
    %c0_i32 = arith.constant 0 : i32
    %c0_i32_0 = arith.constant 0 : i32
    %c0_i32_1 = arith.constant 0 : i32
    return %arg0, %c0_i32, %c0_i32_0 : i32, i32, i32
  }
}

</mosaic_0001>

<llo_original>
// kernel: tpu_custom_call.1
$region0: #{tpu_custom_call.1}
  #allocation0 [shape = 'u32[]', space=smem, size = 0x4, offset = 0x4, fixed_abs, tag = 'smem constant byte address 0x4 - core index']
  #allocation1 [shape = 'u32[144,128]{1,0:T(1,128)}', space=vmem, size = 0x12000, scoped, tag = 'internal scratch']
  #allocation2 [shape = 'bf16[16,128]{1,0:T(16,128)(2,1)}', space=vmem, size = 0x1000, scoped, tag = 'scratch operand']
  %s0 = inlined_call_operand.hbm [shape: bf16[2,8,128], index: 0, kind: input, shape index: {}]
  %s1 = inlined_call_operand.hbm [shape: bf16[3,5,128,128], index: 1, kind: input, shape index: {}]
  %s2 = inlined_call_operand.vmem [shape: f32[3,1,128], index: 2, kind: input, shape index: {}]
  %s3 = inlined_call_operand.vmem [shape: f32[3,1,128], index: 3, kind: input, shape index: {}]
  %s4 = inlined_call_operand.hbm [shape: bf16[128,128], index: 4, kind: input, shape index: {}]
  %s5 = inlined_call_operand.vmem [shape: f32[1,128], index: 5, kind: input, shape index: {}]
  %s6 = inlined_call_operand.hbm [shape: f32[2,8,128], index: 6, kind: output, shape index: {}]
  %s7 = sld [smem:[#allocation0]]
  $region69: #{tpu_custom_call.1} parent=0
    _
  %s9 = ssub.s32 1, %s7
  %s10 = scalar_select 0, %s9, %s7
  $region1: #{tpu_custom_call.1} parent=0
    #allocation3 [shape = 'u8[4096]{0}', space=vmem, size = 0x1000, scoped, tag = 'input window, operand 0']
    #allocation4 [shape = 's32[2]{0}', space=sflag, size = 0x8, scoped, tag = 'scoped memory for tpu_custom_call.1']
    #allocation5 [shape = 's32[2]{0}', space=sflag, size = 0x8, scoped, tag = 'scoped memory for tpu_custom_call.1']
    #allocation6 [shape = 'u8[491520]{0}', space=vmem, size = 0x78000, scoped, tag = 'input window, operand 1, single buffered']
    #allocation7 [shape = 's32[1]{0}', space=sflag, size = 0x4, scoped, tag = 'scoped memory for tpu_custom_call.1']
    #allocation8 [shape = 'u8[32768]{0}', space=vmem, size = 0x8000, scoped, tag = 'input window, operand 4, single buffered']
    #allocation9 [shape = 'u8[8192]{0}', space=vmem, size = 0x2000, scoped, tag = 'output window, operand 0']
    %11 = vsyncpa [#allocation4], 0
    %s12 = scalar_lea.sflag [#allocation4], 1
    %13 = vsyncpa %s12, 0
    %14 = vsyncpa [#allocation7], 0
    %15 = vsyncpa [#allocation5], 0
    %s16 = scalar_lea.sflag [#allocation5], 1
    %17 = vsyncpa %s16, 0
    loop: start=0, step=1, limit=4
    $region2: #{tpu_custom_call.1} parent=1 // loop_pre_header
      _
    $region3: #{tpu_custom_call.1} parent=1 // loop_header
      %s19 = sphi 0, %s23
      %p20 = scmp.ge.s32.totalorder %s19, 4
      %s29 = sphi 0, %s31
      %s32 = sphi 0, %s29
      %s33 = sphi 0, %s32
      %s49 = sphi 0, %s33
      %s53 = sphi 0, %s53
      %s55 = sphi 0, %s53
      %s56 = sphi 0, %s55
      %s70 = sphi 0, %s56
      %s74 = sphi 0, %s74
      %s76 = sphi 0, %s74
      %s77 = sphi 0, %s76
      %s91 = sphi 0, %s77
      %s95 = sphi 0, %s95
      %s97 = sphi 0, %s95
      %s98 = sphi 0, %s97
      %s112 = sphi 0, %s98
      %s116 = sphi 0, %s116
      %s118 = sphi 0, %s116
      %s119 = sphi 0, %s118
      %s133 = sphi 0, %s119
      %s137 = sphi 0, %s137
      %s139 = sphi 0, %s137
      %s140 = sphi 0, %s139
      %s154 = sphi 0, %s140
      %s160 = sphi 0, %s162
      %s163 = sphi 0, %s160
      %s164 = sphi 0, %s163
      %s180 = sphi 0, %s164
    $region4: #{tpu_custom_call.1} parent=1 // loop_header_branch
      %22 = sbr.rel (%p20) target = $region8
    $region5: #{tpu_custom_call.1} parent=1 // loop_body
      %s24 = ssub.s32 %s19, 1
      %s25 = ssub.s32 %s19, 2
      %s26 = sadd.s32 %s19, 1
      %s27 = ssub.s32 %s19, %s26
      %p28 = scmp.eq.s32.totalorder %s27, 0
      %s30 = sadd.s32 %s29, 1
      %s31 = scalar_select %p28, %s29, %s30
      %p34 = pneg %p28
      %p35 = scmp.eq.s32.totalorder %s19, 1
      %p36 = por %p34, %p35
      %p37 = scmp.ne.s32.totalorder %s29, %s32
      %p38 = scmp.eq.s32.totalorder %s19, 0
      %p39 = por %p37, %p38
      %p40 = scmp.ne.s32.totalorder %s29, %s32
      %p41 = scmp.eq.s32.totalorder %s24, 1
      %p42 = por %p40, %p41
      %p43 = scmp.ne.s32.totalorder %s32, %s33
      %p44 = scmp.eq.s32.totalorder %s24, 0
      %p45 = por %p43, %p44
      %p46 = scmp.ne.s32.totalorder %s32, %s33
      %p47 = scmp.eq.s32.totalorder %s25, 1
      %p48 = por %p46, %p47
      %p50 = scmp.ne.s32.totalorder %s33, %s49
      %p51 = scmp.eq.s32.totalorder %s25, 0
      %p52 = por %p50, %p51
      %s54 = sadd.s32 %s53, 1
      %p57 = scmp.eq.s32.totalorder %s19, 1
      %p58 = scmp.ne.s32.totalorder %s53, %s55
      %p59 = scmp.eq.s32.totalorder %s19, 0
      %p60 = por %p58, %p59
      %p61 = scmp.ne.s32.totalorder %s53, %s55
      %p62 = scmp.eq.s32.totalorder %s24, 1
      %p63 = por %p61, %p62
      %p64 = scmp.ne.s32.totalorder %s55, %s56
      %p65 = scmp.eq.s32.totalorder %s24, 0
      %p66 = por %p64, %p65
      %p67 = scmp.ne.s32.totalorder %s55, %s56
      %p68 = scmp.eq.s32.totalorder %s25, 1
      %p69 = por %p67, %p68
      %p71 = scmp.ne.s32.totalorder %s56, %s70
      %p72 = scmp.eq.s32.totalorder %s25, 0
      %p73 = por %p71, %p72
      %s75 = sadd.s32 %s74, 1
      %p78 = scmp.eq.s32.totalorder %s19, 1
      %p79 = scmp.ne.s32.totalorder %s74, %s76
      %p80 = scmp.eq.s32.totalorder %s19, 0
      %p81 = por %p79, %p80
      %p82 = scmp.ne.s32.totalorder %s74, %s76
      %p83 = scmp.eq.s32.totalorder %s24, 1
      %p84 = por %p82, %p83
      %p85 = scmp.ne.s32.totalorder %s76, %s77
      %p86 = scmp.eq.s32.totalorder %s24, 0
      %p87 = por %p85, %p86
      %p88 = scmp.ne.s32.totalorder %s76, %s77
      %p89 = scmp.eq.s32.totalorder %s25, 1
      %p90 = por %p88, %p89
      %p92 = scmp.ne.s32.totalorder %s77, %s91
      %p93 = scmp.eq.s32.totalorder %s25, 0
      %p94 = por %p92, %p93
      %s96 = sadd.s32 %s95, 1
      %p99 = scmp.eq.s32.totalorder %s19, 1
      %p100 = scmp.ne.s32.totalorder %s95, %s97
      %p101 = scmp.eq.s32.totalorder %s19, 0
      %p102 = por %p100, %p101
      %p103 = scmp.ne.s32.totalorder %s95, %s97
      %p104 = scmp.eq.s32.totalorder %s24, 1
      %p105 = por %p103, %p104
      %p106 = scmp.ne.s32.totalorder %s97, %s98
      %p107 = scmp.eq.s32.totalorder %s24, 0
      %p108 = por %p106, %p107
      %p109 = scmp.ne.s32.totalorder %s97, %s98
      %p110 = scmp.eq.s32.totalorder %s25, 1
      %p111 = por %p109, %p110
      %p113 = scmp.ne.s32.totalorder %s98, %s112
      %p114 = scmp.eq.s32.totalorder %s25, 0
      %p115 = por %p113, %p114
      %s117 = sadd.s32 %s116, 1
      %p120 = scmp.eq.s32.totalorder %s19, 1
      %p121 = scmp.ne.s32.totalorder %s116, %s118
      %p122 = scmp.eq.s32.totalorder %s19, 0
      %p123 = por %p121, %p122
      %p124 = scmp.ne.s32.totalorder %s116, %s118
      %p125 = scmp.eq.s32.totalorder %s24, 1
      %p126 = por %p124, %p125
      %p127 = scmp.ne.s32.totalorder %s118, %s119
      %p128 = scmp.eq.s32.totalorder %s24, 0
      %p129 = por %p127, %p128
      %p130 = scmp.ne.s32.totalorder %s118, %s119
      %p131 = scmp.eq.s32.totalorder %s25, 1
      %p132 = por %p130, %p131
      %p134 = scmp.ne.s32.totalorder %s119, %s133
      %p135 = scmp.eq.s32.totalorder %s25, 0
      %p136 = por %p134, %p135
      %s138 = sadd.s32 %s137, 1
      %p141 = scmp.eq.s32.totalorder %s19, 1
      %p142 = scmp.ne.s32.totalorder %s137, %s139
      %p143 = scmp.eq.s32.totalorder %s19, 0
      %p144 = por %p142, %p143
      %p145 = scmp.ne.s32.totalorder %s137, %s139
      %p146 = scmp.eq.s32.totalorder %s24, 1
      %p147 = por %p145, %p146
      %p148 = scmp.ne.s32.totalorder %s139, %s140
      %p149 = scmp.eq.s32.totalorder %s24, 0
      %p150 = por %p148, %p149
      %p151 = scmp.ne.s32.totalorder %s139, %s140
      %p152 = scmp.eq.s32.totalorder %s25, 1
      %p153 = por %p151, %p152
      %p155 = scmp.ne.s32.totalorder %s140, %s154
      %p156 = scmp.eq.s32.totalorder %s25, 0
      %p157 = por %p155, %p156
      %s158 = ssub.s32 %s19, %s26
      %p159 = scmp.eq.s32.totalorder %s158, 0
      %s161 = sadd.s32 %s160, 1
      %s162 = scalar_select %p159, %s160, %s161
      %p165 = pneg %p159
      %p166 = scmp.eq.s32.totalorder %s19, 1
      %p167 = por %p165, %p166
      %p168 = scmp.ne.s32.totalorder %s160, %s163
      %p169 = scmp.eq.s32.totalorder %s19, 0
      %p170 = por %p168, %p169
      %p171 = scmp.ne.s32.totalorder %s160, %s163
      %p172 = scmp.eq.s32.totalorder %s24, 1
      %p173 = por %p171, %p172
      %p174 = scmp.ne.s32.totalorder %s163, %s164
      %p175 = scmp.eq.s32.totalorder %s24, 0
      %p176 = por %p174, %p175
      %p177 = scmp.ne.s32.totalorder %s163, %s164
      %p178 = scmp.eq.s32.totalorder %s25, 1
      %p179 = por %p177, %p178
      %p181 = scmp.ne.s32.totalorder %s164, %s180
      %p182 = scmp.eq.s32.totalorder %s25, 0
      %p183 = por %p181, %p182
      %p184 = scmp.le.s32.totalorder 1, %s19
      %p185 = scmp.lt.s32.totalorder %s19, 3
      %p186 = pnand %p184, %p185
      %p187 = pneg %p186
      // Predicated region
      $region9: #{tpu_custom_call.1} parent=5 // pred_check
        _
      $region10: #{tpu_custom_call.1} parent=5 // pred_check_branch
        %189 = sbr.rel (%p186) target = $region12
      $region11: #{tpu_custom_call.1} parent=5 // pred_region
        %s190 = ssub.s32 %s19, 1
        // Predicated region
        $region13: #{tpu_custom_call.1} parent=11 // pred_check
          %p191 = pneg %p66
        $region14: #{tpu_custom_call.1} parent=11 // pred_check_branch
          %193 = sbr.rel (%p191) target = $region16
        $region15: #{tpu_custom_call.1} parent=11 // pred_region
          %s195 = ssub.s32 15360, 15360
          %196 = vsyncadd [#allocation7], %s195
          %s197 = sshll.u32 [#allocation6], 4
          %s198 = int_to_ptr.vmem [resolvable:$true] %s197
          %203 = dma.hbm_to_vmem [thread:$0]  %s1, 15360, %s198, [#allocation7], 64, 64, 4
        $region16: #{tpu_custom_call.1} parent=11 // pred_fallthru
          _
        // Predicated region
        $region17: #{tpu_custom_call.1} parent=11 // pred_check
          %p204 = pneg %p87
        $region18: #{tpu_custom_call.1} parent=11 // pred_check_branch
          %206 = sbr.rel (%p204) target = $region20
        $region19: #{tpu_custom_call.1} parent=11 // pred_region
          _
        $region20: #{tpu_custom_call.1} parent=11 // pred_fallthru
          _
        // Predicated region
        $region21: #{tpu_custom_call.1} parent=11 // pred_check
          %p207 = pneg %p108
        $region22: #{tpu_custom_call.1} parent=11 // pred_check_branch
          %209 = sbr.rel (%p207) target = $region24
        $region23: #{tpu_custom_call.1} parent=11 // pred_region
          _
        $region24: #{tpu_custom_call.1} parent=11 // pred_fallthru
          _
        // Predicated region
        $region25: #{tpu_custom_call.1} parent=11 // pred_check
          %p210 = pneg %p129
        $region26: #{tpu_custom_call.1} parent=11 // pred_check_branch
          %212 = sbr.rel (%p210) target = $region28
        $region27: #{tpu_custom_call.1} parent=11 // pred_region
          %s214 = ssub.s32 1024, 1024
          %215 = vsyncadd [#allocation7], %s214
          %s216 = sshll.u32 [#allocation8], 4
          %s217 = int_to_ptr.vmem [resolvable:$true] %s216
          %222 = dma.hbm_to_vmem [thread:$0]  %s4, 1024, %s217, [#allocation7], 64, 64, 4
        $region28: #{tpu_custom_call.1} parent=11 // pred_fallthru
          _
        // Predicated region
        $region29: #{tpu_custom_call.1} parent=11 // pred_check
          %p223 = pneg %p150
        $region30: #{tpu_custom_call.1} parent=11 // pred_check_branch
          %225 = sbr.rel (%p223) target = $region32
        $region31: #{tpu_custom_call.1} parent=11 // pred_region
          _
        $region32: #{tpu_custom_call.1} parent=11 // pred_fallthru
          _
      $region12: #{tpu_custom_call.1} parent=5 // pred_fallthru
        _
      %p226 = scmp.lt.s32.totalorder %s19, 2
      // Predicated region
      $region33: #{tpu_custom_call.1} parent=5 // pred_check
        %p227 = pneg %p226
      $region34: #{tpu_custom_call.1} parent=5 // pred_check_branch
        %229 = sbr.rel (%p227) target = $region36
      $region35: #{tpu_custom_call.1} parent=5 // pred_region
        // Predicated region
        $region37: #{tpu_custom_call.1} parent=35 // pred_check
          %p230 = pneg %p39
        $region38: #{tpu_custom_call.1} parent=35 // pred_check_branch
          %232 = sbr.rel (%p230) target = $region40
        $region39: #{tpu_custom_call.1} parent=35 // pred_region
          %s233 = sand.u32 %s29, 1
          %s234 = scalar_lea.sflag [#allocation4], %s233
          %s235 = sand.u32 %s29, 1
          %s236 = smul.addr %s235, 4
          %s237 = scalar_lea.vmem [#allocation3], %s236
          %s239 = ssub.s32 64, 64
          %240 = vsyncadd %s234, %s239
          %s241 = smul.addr %s19, 64
          %s242 = scalar_lea.hbm %s0, %s241
          %s244 = sshll.u32 %s237, 4
          %s245 = int_to_ptr.vmem [resolvable:$true] %s244
          %247 = dma.hbm_to_vmem [thread:$0]  %s242, 64, %s245, %s234
        $region40: #{tpu_custom_call.1} parent=35 // pred_fallthru
          _
      $region36: #{tpu_custom_call.1} parent=5 // pred_fallthru
        _
      %p248 = scmp.le.s32.totalorder 1, %s19
      %p249 = scmp.lt.s32.totalorder %s19, 3
      %p250 = pnand %p248, %p249
      %p251 = pneg %p250
      // Predicated region
      $region41: #{tpu_custom_call.1} parent=5 // pred_check
        _
      $region42: #{tpu_custom_call.1} parent=5 // pred_check_branch
        %253 = sbr.rel (%p250) target = $region44
      $region43: #{tpu_custom_call.1} parent=5 // pred_region
        %s254 = ssub.s32 %s19, 1
        %s255 = sand.u32 %s32, 1
        %s256 = scalar_lea.sflag [#allocation4], %s255
        %s257 = sand.u32 %s32, 1
        %s258 = smul.addr %s257, 4
        %s259 = scalar_lea.vmem [#allocation3], %s258
        // Predicated region
        $region45: #{tpu_custom_call.1} parent=43 // pred_check
          %p260 = pneg %p45
        $region46: #{tpu_custom_call.1} parent=43 // pred_check_branch
          %262 = sbr.rel (%p260) target = $region48
        $region47: #{tpu_custom_call.1} parent=43 // pred_region
          %263 = dma.done %s256, 64
        $region48: #{tpu_custom_call.1} parent=43 // pred_fallthru
          _
        // Predicated region
        $region49: #{tpu_custom_call.1} parent=43 // pred_check
          %p264 = pneg %p66
        $region50: #{tpu_custom_call.1} parent=43 // pred_check_branch
          %266 = sbr.rel (%p264) target = $region52
        $region51: #{tpu_custom_call.1} parent=43 // pred_region
          %267 = dma.done [#allocation7], 15360
        $region52: #{tpu_custom_call.1} parent=43 // pred_fallthru
          _
        // Predicated region
        $region53: #{tpu_custom_call.1} parent=43 // pred_check
          %p268 = pneg %p129
        $region54: #{tpu_custom_call.1} parent=43 // pred_check_branch
          %270 = sbr.rel (%p268) target = $region56
        $region55: #{tpu_custom_call.1} parent=43 // pred_region
          %271 = dma.done [#allocation7], 1024
        $region56: #{tpu_custom_call.1} parent=43 // pred_fallthru
          _
        %s272 = sand.u32 %s32, 1
        %s273 = scalar_lea.sflag [#allocation4], %s272
        %s274 = sand.u32 %s32, 1
        %s275 = smul.addr %s274, 4
        %s276 = scalar_lea.vmem [#allocation3], %s275
        %p277 = pneg %p45
        %p278 = pneg %p42
        %p279 = pneg %p66
        %p280 = pneg %p63
        %p281 = pneg %p87
        %p282 = pneg %p84
        %p283 = pneg %p108
        %p284 = pneg %p105
        %p285 = pneg %p129
        %p286 = pneg %p126
        %p287 = pneg %p150
        %p288 = pneg %p147
        %p289 = pneg %p176
        %p290 = pneg %p173
        %s291 = sand.u32 %s163, 1
        %s292 = scalar_lea.sflag [#allocation5], %s291
        %s293 = sand.u32 %s163, 1
        %s294 = smul.addr %s293, 8
        %s295 = scalar_lea.vmem [#allocation9], %s294
        %297 = vst [vmem:[#allocation2] sm:$0xff] 0
        %v298 = vld [vmem:[%s259] sm:$0xf]
        %v300 = vunpack.c.l.b16 %v298
        %v301 = vpack.c.b16 %v300, %v300
        %v302 = vrot.slane %v301, 7
        %304 = vst [vmem:[#allocation2] sm:$0x1e] %v302
        %v305 = vld [vmem:[#allocation2] sm:$0xff]
        %v306 = vld [vmem:[#allocation6] sm:$0xf]
        %v307 = vld [vmem:[#allocation6 + $0x4] sm:$0xf]
        %v308 = vld [vmem:[#allocation6 + $0x8] sm:$0xf]
        %v309 = vld [vmem:[#allocation6 + $0xc] sm:$0xf]
        %v310 = vld [vmem:[#allocation6 + $0x10] sm:$0xf]
        %v311 = vld [vmem:[#allocation6 + $0x14] sm:$0xf]
        %v312 = vld [vmem:[#allocation6 + $0x18] sm:$0xf]
        %v313 = vld [vmem:[#allocation6 + $0x1c] sm:$0xf]
        %v314 = vld [vmem:[#allocation6 + $0x20] sm:$0xf]
        %v315 = vld [vmem:[#allocation6 + $0x24] sm:$0xf]
        %v316 = vld [vmem:[#allocation6 + $0x28] sm:$0xf]
        %v317 = vld [vmem:[#allocation6 + $0x2c] sm:$0xf]
        %v318 = vld [vmem:[#allocation6 + $0x30] sm:$0xf]
        %v319 = vld [vmem:[#allocation6 + $0x34] sm:$0xf]
        %v320 = vld [vmem:[#allocation6 + $0x38] sm:$0xf]
        %v321 = vld [vmem:[#allocation6 + $0x3c] sm:$0xf]
        %s322 = scalar_lea.vmem [#allocation6], 64
        %v323 = vld [vmem:[%s322] sm:$0xf]
        %v324 = vld [vmem:[%s322 + $0x4] sm:$0xf]
        %v325 = vld [vmem:[%s322 + $0x8] sm:$0xf]
        %v326 = vld [vmem:[%s322 + $0xc] sm:$0xf]
        %v327 = vld [vmem:[%s322 + $0x10] sm:$0xf]
        %v328 = vld [vmem:[%s322 + $0x14] sm:$0xf]
        %v329 = vld [vmem:[%s322 + $0x18] sm:$0xf]
        %v330 = vld [vmem:[%s322 + $0x1c] sm:$0xf]
        %v331 = vld [vmem:[%s322 + $0x20] sm:$0xf]
        %v332 = vld [vmem:[%s322 + $0x24] sm:$0xf]
        %v333 = vld [vmem:[%s322 + $0x28] sm:$0xf]
        %v334 = vld [vmem:[%s322 + $0x2c] sm:$0xf]
        %v335 = vld [vmem:[%s322 + $0x30] sm:$0xf]
        %v336 = vld [vmem:[%s322 + $0x34] sm:$0xf]
        %v337 = vld [vmem:[%s322 + $0x38] sm:$0xf]
        %v338 = vld [vmem:[%s322 + $0x3c] sm:$0xf]
        %v340 = vshrl.u32 %v305, 16
        %v342 = vshll.u32 %v305, 16
        %v344 = vrot.slane %v342, 1
        %v345 = vor.u32 %v340, %v344
        %v363 = vunpack.c.l.b16 %v323
        %v364 = vunpack.c.l.b16 %v324
        %v365 = vunpack.c.l.b16 %v325
        %v366 = vunpack.c.l.b16 %v326
        %v367 = vunpack.c.l.b16 %v327
        %v368 = vunpack.c.l.b16 %v328
        %v369 = vunpack.c.l.b16 %v329
        %v370 = vunpack.c.l.b16 %v330
        %v371 = vunpack.c.l.b16 %v331
        %v372 = vunpack.c.l.b16 %v332
        %v373 = vunpack.c.l.b16 %v333
        %v374 = vunpack.c.l.b16 %v334
        %v375 = vunpack.c.l.b16 %v335
        %v376 = vunpack.c.l.b16 %v336
        %v377 = vunpack.c.l.b16 %v337
        %v378 = vunpack.c.l.b16 %v338
        %v379 = vpack.c.b16 %v364, %v363
        %v380 = vpack.c.b16 %v366, %v365
        %v381 = vpack.c.b16 %v368, %v367
        %v382 = vpack.c.b16 %v370, %v369
        %v383 = vpack.c.b16 %v372, %v371
        %v384 = vpack.c.b16 %v374, %v373
        %v385 = vpack.c.b16 %v376, %v375
        %v386 = vpack.c.b16 %v378, %v377
        %395 = vmatprep.subr.bf16.mxu0 0
        %396 = vmatpush1.bf16.msra.mxu0 %v379
        %397 = vmatprep.subr.bf16.mxu0 0
        %398 = vmatpush1.bf16.msra.mxu0 %v380
        %399 = vmatprep.subr.bf16.mxu0 0
        %400 = vmatpush1.bf16.msra.mxu0 %v381
        %401 = vmatprep.subr.bf16.mxu0 0
        %402 = vmatpush1.bf16.msra.mxu0 %v382
        %403 = vmatprep.subr.bf16.mxu0 0
        %404 = vmatpush1.bf16.msra.mxu0 %v383
        %405 = vmatprep.subr.bf16.mxu0 0
        %406 = vmatpush1.bf16.msra.mxu0 %v384
        %407 = vmatprep.subr.bf16.mxu0 0
        %408 = vmatpush1.bf16.msra.mxu0 %v385
        %409 = vmatprep.subr.bf16.mxu0 0
        %410 = vmatpush1.bf16.msra.mxu0 %v386
        %411 = vmatprep.subr.bf16.mxu0 0
        %412 = vmatpush1.bf16.msra.mxu0 0
        %413 = vmatprep.subr.bf16.mxu0 0
        %414 = vmatpush1.bf16.msra.mxu0 0
        %415 = vmatprep.subr.bf16.mxu0 0
        %416 = vmatpush1.bf16.msra.mxu0 0
        %417 = vmatprep.subr.bf16.mxu0 0
        %418 = vmatpush1.bf16.msra.mxu0 0
        %419 = vmatprep.subr.bf16.mxu0 0
        %420 = vmatpush1.bf16.msra.mxu0 0
        %421 = vmatprep.subr.bf16.mxu0 0
        %422 = vmatpush1.bf16.msra.mxu0 0
        %423 = vmatprep.subr.bf16.mxu0 0
        %424 = vmatpush1.bf16.msra.mxu0 0
        %425 = vmatprep.subr.bf16.mxu0 0
        %426 = vmatpush1.bf16.msra.mxu0 0
        %427 = vmatprep.mubr.bf16.mxu0 0
        %428 = vmatmul.mubr.bf16.gmra.mrb[0].mxu0 %v345
        %v429 = vpop.f32.mrb[0].mxu0
        %v430 = vadd.f32 0.0, %v429
        %v431 = vpop.f32.mrb[0].mxu0
        %v432 = vpop.f32.mrb[0].mxu0
        %v433 = vpop.f32.mrb[0].mxu0
        %434 = vdwg.mxu0
        %v451 = vunpack.c.l.b16 %v306
        %v452 = vunpack.c.l.b16 %v307
        %v453 = vunpack.c.l.b16 %v308
        %v454 = vunpack.c.l.b16 %v309
        %v455 = vunpack.c.l.b16 %v310
        %v456 = vunpack.c.l.b16 %v311
        %v457 = vunpack.c.l.b16 %v312
        %v458 = vunpack.c.l.b16 %v313
        %v459 = vunpack.c.l.b16 %v314
        %v460 = vunpack.c.l.b16 %v315
        %v461 = vunpack.c.l.b16 %v316
        %v462 = vunpack.c.l.b16 %v317
        %v463 = vunpack.c.l.b16 %v318
        %v464 = vunpack.c.l.b16 %v319
        %v465 = vunpack.c.l.b16 %v320
        %v466 = vunpack.c.l.b16 %v321
        %v467 = vpack.c.b16 %v452, %v451
        %v468 = vpack.c.b16 %v454, %v453
        %v469 = vpack.c.b16 %v456, %v455
        %v470 = vpack.c.b16 %v458, %v457
        %v471 = vpack.c.b16 %v460, %v459
        %v472 = vpack.c.b16 %v462, %v461
        %v473 = vpack.c.b16 %v464, %v463
        %v474 = vpack.c.b16 %v466, %v465
        %483 = vmatprep.subr.bf16.mxu0 0
        %484 = vmatpush1.bf16.msra.mxu0 %v467
        %485 = vmatprep.subr.bf16.mxu0 0
        %486 = vmatpush1.bf16.msra.mxu0 %v468
        %487 = vmatprep.subr.bf16.mxu0 0
        %488 = vmatpush1.bf16.msra.mxu0 %v469
        %489 = vmatprep.subr.bf16.mxu0 0
        %490 = vmatpush1.bf16.msra.mxu0 %v470
        %491 = vmatprep.subr.bf16.mxu0 0
        %492 = vmatpush1.bf16.msra.mxu0 %v471
        %493 = vmatprep.subr.bf16.mxu0 0
        %494 = vmatpush1.bf16.msra.mxu0 %v472
        %495 = vmatprep.subr.bf16.mxu0 0
        %496 = vmatpush1.bf16.msra.mxu0 %v473
        %497 = vmatprep.subr.bf16.mxu0 0
        %498 = vmatpush1.bf16.msra.mxu0 %v474
        %499 = vmatprep.subr.bf16.mxu0 0
        %500 = vmatpush1.bf16.msra.mxu0 0
        %501 = vmatprep.subr.bf16.mxu0 0
        %502 = vmatpush1.bf16.msra.mxu0 0
        %503 = vmatprep.subr.bf16.mxu0 0
        %504 = vmatpush1.bf16.msra.mxu0 0
        %505 = vmatprep.subr.bf16.mxu0 0
        %506 = vmatpush1.bf16.msra.mxu0 0
        %507 = vmatprep.subr.bf16.mxu0 0
        %508 = vmatpush1.bf16.msra.mxu0 0
        %509 = vmatprep.subr.bf16.mxu0 0
        %510 = vmatpush1.bf16.msra.mxu0 0
        %511 = vmatprep.subr.bf16.mxu0 0
        %512 = vmatpush1.bf16.msra.mxu0 0
        %513 = vmatprep.subr.bf16.mxu0 0
        %514 = vmatpush1.bf16.msra.mxu0 0
        %515 = vmatprep.mubr.bf16.mxu0 0
        %516 = vmatmul.mubr.bf16.gmra.mrb[0].mxu0 %v305
        %v517 = vpop.f32.mrb[0].mxu0
        %v518 = vadd.f32 %v430, %v517
        %v519 = vpop.f32.mrb[0].mxu0
        %v520 = vpop.f32.mrb[0].mxu0
        %v521 = vpop.f32.mrb[0].mxu0
        %522 = vdwg.mxu0
        %s523 = scalar_lea.vmem [#allocation6], 128
        %v524 = vld [vmem:[%s523] sm:$0xf]
        %v525 = vld [vmem:[%s523 + $0x4] sm:$0xf]
        %v526 = vld [vmem:[%s523 + $0x8] sm:$0xf]
        %v527 = vld [vmem:[%s523 + $0xc] sm:$0xf]
        %v528 = vld [vmem:[%s523 + $0x10] sm:$0xf]
        %v529 = vld [vmem:[%s523 + $0x14] sm:$0xf]
        %v530 = vld [vmem:[%s523 + $0x18] sm:$0xf]
        %v531 = vld [vmem:[%s523 + $0x1c] sm:$0xf]
        %v532 = vld [vmem:[%s523 + $0x20] sm:$0xf]
        %v533 = vld [vmem:[%s523 + $0x24] sm:$0xf]
        %v534 = vld [vmem:[%s523 + $0x28] sm:$0xf]
        %v535 = vld [vmem:[%s523 + $0x2c] sm:$0xf]
        %v536 = vld [vmem:[%s523 + $0x30] sm:$0xf]
        %v537 = vld [vmem:[%s523 + $0x34] sm:$0xf]
        %v538 = vld [vmem:[%s523 + $0x38] sm:$0xf]
        %v539 = vld [vmem:[%s523 + $0x3c] sm:$0xf]
        %v541 = vrot.slane %v305, 1
        %v559 = vunpack.c.l.b16 %v524
        %v560 = vunpack.c.l.b16 %v525
        %v561 = vunpack.c.l.b16 %v526
        %v562 = vunpack.c.l.b16 %v527
        %v563 = vunpack.c.l.b16 %v528
        %v564 = vunpack.c.l.b16 %v529
        %v565 = vunpack.c.l.b16 %v530
        %v566 = vunpack.c.l.b16 %v531
        %v567 = vunpack.c.l.b16 %v532
        %v568 = vunpack.c.l.b16 %v533
        %v569 = vunpack.c.l.b16 %v534
        %v570 = vunpack.c.l.b16 %v535
        %v571 = vunpack.c.l.b16 %v536
        %v572 = vunpack.c.l.b16 %v537
        %v573 = vunpack.c.l.b16 %v538
        %v574 = vunpack.c.l.b16 %v539
        %v575 = vpack.c.b16 %v560, %v559
        %v576 = vpack.c.b16 %v562, %v561
        %v577 = vpack.c.b16 %v564, %v563
        %v578 = vpack.c.b16 %v566, %v565
        %v579 = vpack.c.b16 %v568, %v567
        %v580 = vpack.c.b16 %v570, %v569
        %v581 = vpack.c.b16 %v572, %v571
        %v582 = vpack.c.b16 %v574, %v573
        %591 = vmatprep.subr.bf16.mxu0 0
        %592 = vmatpush1.bf16.msra.mxu0 %v575
        %593 = vmatprep.subr.bf16.mxu0 0
        %594 = vmatpush1.bf16.msra.mxu0 %v576
        %595 = vmatprep.subr.bf16.mxu0 0
        %596 = vmatpush1.bf16.msra.mxu0 %v577
        %597 = vmatprep.subr.bf16.mxu0 0
        %598 = vmatpush1.bf16.msra.mxu0 %v578
        %599 = vmatprep.subr.bf16.mxu0 0
        %600 = vmatpush1.bf16.msra.mxu0 %v579
        %601 = vmatprep.subr.bf16.mxu0 0
        %602 = vmatpush1.bf16.msra.mxu0 %v580
        %603 = vmatprep.subr.bf16.mxu0 0
        %604 = vmatpush1.bf16.msra.mxu0 %v581
        %605 = vmatprep.subr.bf16.mxu0 0
        %606 = vmatpush1.bf16.msra.mxu0 %v582
        %607 = vmatprep.subr.bf16.mxu0 0
        %608 = vmatpush1.bf16.msra.mxu0 0
        %609 = vmatprep.subr.bf16.mxu0 0
        %610 = vmatpush1.bf16.msra.mxu0 0
        %611 = vmatprep.subr.bf16.mxu0 0
        %612 = vmatpush1.bf16.msra.mxu0 0
        %613 = vmatprep.subr.bf16.mxu0 0
        %614 = vmatpush1.bf16.msra.mxu0 0
        %615 = vmatprep.subr.bf16.mxu0 0
        %616 = vmatpush1.bf16.msra.mxu0 0
        %617 = vmatprep.subr.bf16.mxu0 0
        %618 = vmatpush1.bf16.msra.mxu0 0
        %619 = vmatprep.subr.bf16.mxu0 0
        %620 = vmatpush1.bf16.msra.mxu0 0
        %621 = vmatprep.subr.bf16.mxu0 0
        %622 = vmatpush1.bf16.msra.mxu0 0
        %623 = vmatprep.mubr.bf16.mxu0 0
        %624 = vmatmul.mubr.bf16.gmra.mrb[0].mxu0 %v541
        %v625 = vpop.f32.mrb[0].mxu0
        %v626 = vadd.f32 0.0, %v625
        %v627 = vpop.f32.mrb[0].mxu0
        %v628 = vpop.f32.mrb[0].mxu0
        %v629 = vpop.f32.mrb[0].mxu0
        %630 = vdwg.mxu0
        %v631 = vadd.f32 %v518, %v626
        %s632 = scalar_lea.vmem [#allocation6], 192
        %v633 = vld [vmem:[%s632] sm:$0xf]
        %v634 = vld [vmem:[%s632 + $0x4] sm:$0xf]
        %v635 = vld [vmem:[%s632 + $0x8] sm:$0xf]
        %v636 = vld [vmem:[%s632 + $0xc] sm:$0xf]
        %v637 = vld [vmem:[%s632 + $0x10] sm:$0xf]
        %v638 = vld [vmem:[%s632 + $0x14] sm:$0xf]
        %v639 = vld [vmem:[%s632 + $0x18] sm:$0xf]
        %v640 = vld [vmem:[%s632 + $0x1c] sm:$0xf]
        %v641 = vld [vmem:[%s632 + $0x20] sm:$0xf]
        %v642 = vld [vmem:[%s632 + $0x24] sm:$0xf]
        %v643 = vld [vmem:[%s632 + $0x28] sm:$0xf]
        %v644 = vld [vmem:[%s632 + $0x2c] sm:$0xf]
        %v645 = vld [vmem:[%s632 + $0x30] sm:$0xf]
        %v646 = vld [vmem:[%s632 + $0x34] sm:$0xf]
        %v647 = vld [vmem:[%s632 + $0x38] sm:$0xf]
        %v648 = vld [vmem:[%s632 + $0x3c] sm:$0xf]
        %v649 = vrot.slane %v340, 1
        %v650 = vrot.slane %v342, 2
        %v651 = vor.u32 %v649, %v650
        %v669 = vunpack.c.l.b16 %v633
        %v670 = vunpack.c.l.b16 %v634
        %v671 = vunpack.c.l.b16 %v635
        %v672 = vunpack.c.l.b16 %v636
        %v673 = vunpack.c.l.b16 %v637
        %v674 = vunpack.c.l.b16 %v638
        %v675 = vunpack.c.l.b16 %v639
        %v676 = vunpack.c.l.b16 %v640
        %v677 = vunpack.c.l.b16 %v641
        %v678 = vunpack.c.l.b16 %v642
        %v679 = vunpack.c.l.b16 %v643
        %v680 = vunpack.c.l.b16 %v644
        %v681 = vunpack.c.l.b16 %v645
        %v682 = vunpack.c.l.b16 %v646
        %v683 = vunpack.c.l.b16 %v647
        %v684 = vunpack.c.l.b16 %v648
        %v685 = vpack.c.b16 %v670, %v669
        %v686 = vpack.c.b16 %v672, %v671
        %v687 = vpack.c.b16 %v674, %v673
        %v688 = vpack.c.b16 %v676, %v675
        %v689 = vpack.c.b16 %v678, %v677
        %v690 = vpack.c.b16 %v680, %v679
        %v691 = vpack.c.b16 %v682, %v681
        %v692 = vpack.c.b16 %v684, %v683
        %701 = vmatprep.subr.bf16.mxu0 0
        %702 = vmatpush1.bf16.msra.mxu0 %v685
        %703 = vmatprep.subr.bf16.mxu0 0
        %704 = vmatpush1.bf16.msra.mxu0 %v686
        %705 = vmatprep.subr.bf16.mxu0 0
        %706 = vmatpush1.bf16.msra.mxu0 %v687
        %707 = vmatprep.subr.bf16.mxu0 0
        %708 = vmatpush1.bf16.msra.mxu0 %v688
        %709 = vmatprep.subr.bf16.mxu0 0
        %710 = vmatpush1.bf16.msra.mxu0 %v689
        %711 = vmatprep.subr.bf16.mxu0 0
        %712 = vmatpush1.bf16.msra.mxu0 %v690
        %713 = vmatprep.subr.bf16.mxu0 0
        %714 = vmatpush1.bf16.msra.mxu0 %v691
        %715 = vmatprep.subr.bf16.mxu0 0
        %716 = vmatpush1.bf16.msra.mxu0 %v692
        %717 = vmatprep.subr.bf16.mxu0 0
        %718 = vmatpush1.bf16.msra.mxu0 0
        %719 = vmatprep.subr.bf16.mxu0 0
        %720 = vmatpush1.bf16.msra.mxu0 0
        %721 = vmatprep.subr.bf16.mxu0 0
        %722 = vmatpush1.bf16.msra.mxu0 0
        %723 = vmatprep.subr.bf16.mxu0 0
        %724 = vmatpush1.bf16.msra.mxu0 0
        %725 = vmatprep.subr.bf16.mxu0 0
        %726 = vmatpush1.bf16.msra.mxu0 0
        %727 = vmatprep.subr.bf16.mxu0 0
        %728 = vmatpush1.bf16.msra.mxu0 0
        %729 = vmatprep.subr.bf16.mxu0 0
        %730 = vmatpush1.bf16.msra.mxu0 0
        %731 = vmatprep.subr.bf16.mxu0 0
        %732 = vmatpush1.bf16.msra.mxu0 0
        %733 = vmatprep.mubr.bf16.mxu0 0
        %734 = vmatmul.mubr.bf16.gmra.mrb[0].mxu0 %v651
        %v735 = vpop.f32.mrb[0].mxu0
        %v736 = vadd.f32 0.0, %v735
        %v737 = vpop.f32.mrb[0].mxu0
        %v738 = vpop.f32.mrb[0].mxu0
        %v739 = vpop.f32.mrb[0].mxu0
        %740 = vdwg.mxu0
        %v741 = vadd.f32 %v631, %v736
        %s742 = scalar_lea.vmem [#allocation6], 256
        %v743 = vld [vmem:[%s742] sm:$0xf]
        %v744 = vld [vmem:[%s742 + $0x4] sm:$0xf]
        %v745 = vld [vmem:[%s742 + $0x8] sm:$0xf]
        %v746 = vld [vmem:[%s742 + $0xc] sm:$0xf]
        %v747 = vld [vmem:[%s742 + $0x10] sm:$0xf]
        %v748 = vld [vmem:[%s742 + $0x14] sm:$0xf]
        %v749 = vld [vmem:[%s742 + $0x18] sm:$0xf]
        %v750 = vld [vmem:[%s742 + $0x1c] sm:$0xf]
        %v751 = vld [vmem:[%s742 + $0x20] sm:$0xf]
        %v752 = vld [vmem:[%s742 + $0x24] sm:$0xf]
        %v753 = vld [vmem:[%s742 + $0x28] sm:$0xf]
        %v754 = vld [vmem:[%s742 + $0x2c] sm:$0xf]
        %v755 = vld [vmem:[%s742 + $0x30] sm:$0xf]
        %v756 = vld [vmem:[%s742 + $0x34] sm:$0xf]
        %v757 = vld [vmem:[%s742 + $0x38] sm:$0xf]
        %v758 = vld [vmem:[%s742 + $0x3c] sm:$0xf]
        %v759 = vrot.slane %v305, 2
        %v777 = vunpack.c.l.b16 %v743
        %v778 = vunpack.c.l.b16 %v744
        %v779 = vunpack.c.l.b16 %v745
        %v780 = vunpack.c.l.b16 %v746
        %v781 = vunpack.c.l.b16 %v747
        %v782 = vunpack.c.l.b16 %v748
        %v783 = vunpack.c.l.b16 %v749
        %v784 = vunpack.c.l.b16 %v750
        %v785 = vunpack.c.l.b16 %v751
        %v786 = vunpack.c.l.b16 %v752
        %v787 = vunpack.c.l.b16 %v753
        %v788 = vunpack.c.l.b16 %v754
        %v789 = vunpack.c.l.b16 %v755
        %v790 = vunpack.c.l.b16 %v756
        %v791 = vunpack.c.l.b16 %v757
        %v792 = vunpack.c.l.b16 %v758
        %v793 = vpack.c.b16 %v778, %v777
        %v794 = vpack.c.b16 %v780, %v779
        %v795 = vpack.c.b16 %v782, %v781
        %v796 = vpack.c.b16 %v784, %v783
        %v797 = vpack.c.b16 %v786, %v785
        %v798 = vpack.c.b16 %v788, %v787
        %v799 = vpack.c.b16 %v790, %v789
        %v800 = vpack.c.b16 %v792, %v791
        %809 = vmatprep.subr.bf16.mxu0 0
        %810 = vmatpush1.bf16.msra.mxu0 %v793
        %811 = vmatprep.subr.bf16.mxu0 0
        %812 = vmatpush1.bf16.msra.mxu0 %v794
        %813 = vmatprep.subr.bf16.mxu0 0
        %814 = vmatpush1.bf16.msra.mxu0 %v795
        %815 = vmatprep.subr.bf16.mxu0 0
        %816 = vmatpush1.bf16.msra.mxu0 %v796
        %817 = vmatprep.subr.bf16.mxu0 0
        %818 = vmatpush1.bf16.msra.mxu0 %v797
        %819 = vmatprep.subr.bf16.mxu0 0
        %820 = vmatpush1.bf16.msra.mxu0 %v798
        %821 = vmatprep.subr.bf16.mxu0 0
        %822 = vmatpush1.bf16.msra.mxu0 %v799
        %823 = vmatprep.subr.bf16.mxu0 0
        %824 = vmatpush1.bf16.msra.mxu0 %v800
        %825 = vmatprep.subr.bf16.mxu0 0
        %826 = vmatpush1.bf16.msra.mxu0 0
        %827 = vmatprep.subr.bf16.mxu0 0
        %828 = vmatpush1.bf16.msra.mxu0 0
        %829 = vmatprep.subr.bf16.mxu0 0
        %830 = vmatpush1.bf16.msra.mxu0 0
        %831 = vmatprep.subr.bf16.mxu0 0
        %832 = vmatpush1.bf16.msra.mxu0 0
        %833 = vmatprep.subr.bf16.mxu0 0
        %834 = vmatpush1.bf16.msra.mxu0 0
        %835 = vmatprep.subr.bf16.mxu0 0
        %836 = vmatpush1.bf16.msra.mxu0 0
        %837 = vmatprep.subr.bf16.mxu0 0
        %838 = vmatpush1.bf16.msra.mxu0 0
        %839 = vmatprep.subr.bf16.mxu0 0
        %840 = vmatpush1.bf16.msra.mxu0 0
        %841 = vmatprep.mubr.bf16.mxu0 0
        %842 = vmatmul.mubr.bf16.gmra.mrb[0].mxu0 %v759
        %v843 = vpop.f32.mrb[0].mxu0
        %v844 = vadd.f32 0.0, %v843
        %v845 = vpop.f32.mrb[0].mxu0
        %v846 = vpop.f32.mrb[0].mxu0
        %v847 = vpop.f32.mrb[0].mxu0
        %848 = vdwg.mxu0
        %v849 = vadd.f32 %v741, %v844
        %v850 = vld [vmem:[%s2] sm:$0x1]
        %v852 = vlaneseq
        %v853 = vshrl.u32 %v852, 7
        %v854 = vsub.s32 0, %v853
        %v855 = vrot.slane %v850, %v854
        %v857 = vmul.f32 %v849, %v855
        %v858 = vld [vmem:[%s3] sm:$0x1]
        %v860 = vlaneseq
        %v861 = vshrl.u32 %v860, 7
        %v862 = vsub.s32 0, %v861
        %v863 = vrot.slane %v858, %v862
        %v865 = vadd.f32 %v857, %v863
        %v866 = vmax.f32 %v865, 0.0
        %v867 = vpack.c.bf16 %v866, %v866
        %v869 = vrot.slane %v867, 7
        %871 = vst [vmem:[#allocation2] sm:$0x1e] %v869
        %v872 = vld [vmem:[#allocation2] sm:$0xff]
        %s873 = scalar_lea.vmem [#allocation6], 320
        %v874 = vld [vmem:[%s873] sm:$0xf]
        %v875 = vld [vmem:[%s873 + $0x4] sm:$0xf]
        %v876 = vld [vmem:[%s873 + $0x8] sm:$0xf]
        %v877 = vld [vmem:[%s873 + $0xc] sm:$0xf]
        %v878 = vld [vmem:[%s873 + $0x10] sm:$0xf]
        %v879 = vld [vmem:[%s873 + $0x14] sm:$0xf]
        %v880 = vld [vmem:[%s873 + $0x18] sm:$0xf]
        %v881 = vld [vmem:[%s873 + $0x1c] sm:$0xf]
        %v882 = vld [vmem:[%s873 + $0x20] sm:$0xf]
        %v883 = vld [vmem:[%s873 + $0x24] sm:$0xf]
        %v884 = vld [vmem:[%s873 + $0x28] sm:$0xf]
        %v885 = vld [vmem:[%s873 + $0x2c] sm:$0xf]
        %v886 = vld [vmem:[%s873 + $0x30] sm:$0xf]
        %v887 = vld [vmem:[%s873 + $0x34] sm:$0xf]
        %v888 = vld [vmem:[%s873 + $0x38] sm:$0xf]
        %v889 = vld [vmem:[%s873 + $0x3c] sm:$0xf]
        %s890 = scalar_lea.vmem [#allocation6], 384
        %v891 = vld [vmem:[%s890] sm:$0xf]
        %v892 = vld [vmem:[%s890 + $0x4] sm:$0xf]
        %v893 = vld [vmem:[%s890 + $0x8] sm:$0xf]
        %v894 = vld [vmem:[%s890 + $0xc] sm:$0xf]
        %v895 = vld [vmem:[%s890 + $0x10] sm:$0xf]
        %v896 = vld [vmem:[%s890 + $0x14] sm:$0xf]
        %v897 = vld [vmem:[%s890 + $0x18] sm:$0xf]
        %v898 = vld [vmem:[%s890 + $0x1c] sm:$0xf]
        %v899 = vld [vmem:[%s890 + $0x20] sm:$0xf]
        %v900 = vld [vmem:[%s890 + $0x24] sm:$0xf]
        %v901 = vld [vmem:[%s890 + $0x28] sm:$0xf]
        %v902 = vld [vmem:[%s890 + $0x2c] sm:$0xf]
        %v903 = vld [vmem:[%s890 + $0x30] sm:$0xf]
        %v904 = vld [vmem:[%s890 + $0x34] sm:$0xf]
        %v905 = vld [vmem:[%s890 + $0x38] sm:$0xf]
        %v906 = vld [vmem:[%s890 + $0x3c] sm:$0xf]
        %v908 = vshrl.u32 %v872, 16
        %v910 = vshll.u32 %v872, 16
        %v912 = vrot.slane %v910, 1
        %v913 = vor.u32 %v908, %v912
        %v931 = vunpack.c.l.b16 %v891
        %v932 = vunpack.c.l.b16 %v892
        %v933 = vunpack.c.l.b16 %v893
        %v934 = vunpack.c.l.b16 %v894
        %v935 = vunpack.c.l.b16 %v895
        %v936 = vunpack.c.l.b16 %v896
        %v937 = vunpack.c.l.b16 %v897
        %v938 = vunpack.c.l.b16 %v898
        %v939 = vunpack.c.l.b16 %v899
        %v940 = vunpack.c.l.b16 %v900
        %v941 = vunpack.c.l.b16 %v901
        %v942 = vunpack.c.l.b16 %v902
        %v943 = vunpack.c.l.b16 %v903
        %v944 = vunpack.c.l.b16 %v904
        %v945 = vunpack.c.l.b16 %v905
        %v946 = vunpack.c.l.b16 %v906
        %v947 = vpack.c.b16 %v932, %v931
        %v948 = vpack.c.b16 %v934, %v933
        %v949 = vpack.c.b16 %v936, %v935
        %v950 = vpack.c.b16 %v938, %v937
        %v951 = vpack.c.b16 %v940, %v939
        %v952 = vpack.c.b16 %v942, %v941
        %v953 = vpack.c.b16 %v944, %v943
        %v954 = vpack.c.b16 %v946, %v945
        %963 = vmatprep.subr.bf16.mxu0 0
        %964 = vmatpush1.bf16.msra.mxu0 %v947
        %965 = vmatprep.subr.bf16.mxu0 0
        %966 = vmatpush1.bf16.msra.mxu0 %v948
        %967 = vmatprep.subr.bf16.mxu0 0
        %968 = vmatpush1.bf16.msra.mxu0 %v949
        %969 = vmatprep.subr.bf16.mxu0 0
        %970 = vmatpush1.bf16.msra.mxu0 %v950
        %971 = vmatprep.subr.bf16.mxu0 0
        %972 = vmatpush1.bf16.msra.mxu0 %v951
        %973 = vmatprep.subr.bf16.mxu0 0
        %974 = vmatpush1.bf16.msra.mxu0 %v952
        %975 = vmatprep.subr.bf16.mxu0 0
        %976 = vmatpush1.bf16.msra.mxu0 %v953
        %977 = vmatprep.subr.bf16.mxu0 0
        %978 = vmatpush1.bf16.msra.mxu0 %v954
        %979 = vmatprep.subr.bf16.mxu0 0
        %980 = vmatpush1.bf16.msra.mxu0 0
        %981 = vmatprep.subr.bf16.mxu0 0
        %982 = vmatpush1.bf16.msra.mxu0 0
        %983 = vmatprep.subr.bf16.mxu0 0
        %984 = vmatpush1.bf16.msra.mxu0 0
        %985 = vmatprep.subr.bf16.mxu0 0
        %986 = vmatpush1.bf16.msra.mxu0 0
        %987 = vmatprep.subr.bf16.mxu0 0
        %988 = vmatpush1.bf16.msra.mxu0 0
        %989 = vmatprep.subr.bf16.mxu0 0
        %990 = vmatpush1.bf16.msra.mxu0 0
        %991 = vmatprep.subr.bf16.mxu0 0
        %992 = vmatpush1.bf16.msra.mxu0 0
        %993 = vmatprep.subr.bf16.mxu0 0
        %994 = vmatpush1.bf16.msra.mxu0 0
        %995 = vmatprep.mubr.bf16.mxu0 0
        %996 = vmatmul.mubr.bf16.gmra.mrb[0].mxu0 %v913
        %v997 = vpop.f32.mrb[0].mxu0
        %v998 = vadd.f32 0.0, %v997
        %v999 = vpop.f32.mrb[0].mxu0
        %v1000 = vpop.f32.mrb[0].mxu0
        %v1001 = vpop.f32.mrb[0].mxu0
        %1002 = vdwg.mxu0
        %v1019 = vunpack.c.l.b16 %v874
        %v1020 = vunpack.c.l.b16 %v875
        %v1021 = vunpack.c.l.b16 %v876
        %v1022 = vunpack.c.l.b16 %v877
        %v1023 = vunpack.c.l.b16 %v878
        %v1024 = vunpack.c.l.b16 %v879
        %v1025 = vunpack.c.l.b16 %v880
        %v1026 = vunpack.c.l.b16 %v881
        %v1027 = vunpack.c.l.b16 %v882
        %v1028 = vunpack.c.l.b16 %v883
        %v1029 = vunpack.c.l.b16 %v884
        %v1030 = vunpack.c.l.b16 %v885
        %v1031 = vunpack.c.l.b16 %v886
        %v1032 = vunpack.c.l.b16 %v887
        %v1033 = vunpack.c.l.b16 %v888
        %v1034 = vunpack.c.l.b16 %v889
        %v1035 = vpack.c.b16 %v1020, %v1019
        %v1036 = vpack.c.b16 %v1022, %v1021
        %v1037 = vpack.c.b16 %v1024, %v1023
        %v1038 = vpack.c.b16 %v1026, %v1025
        %v1039 = vpack.c.b16 %v1028, %v1027
        %v1040 = vpack.c.b16 %v1030, %v1029
        %v1041 = vpack.c.b16 %v1032, %v1031
        %v1042 = vpack.c.b16 %v1034, %v1033
        %1051 = vmatprep.subr.bf16.mxu0 0
        %1052 = vmatpush1.bf16.msra.mxu0 %v1035
        %1053 = vmatprep.subr.bf16.mxu0 0
        %1054 = vmatpush1.bf16.msra.mxu0 %v1036
        %1055 = vmatprep.subr.bf16.mxu0 0
        %1056 = vmatpush1.bf16.msra.mxu0 %v1037
        %1057 = vmatprep.subr.bf16.mxu0 0
        %1058 = vmatpush1.bf16.msra.mxu0 %v1038
        %1059 = vmatprep.subr.bf16.mxu0 0
        %1060 = vmatpush1.bf16.msra.mxu0 %v1039
        %1061 = vmatprep.subr.bf16.mxu0 0
        %1062 = vmatpush1.bf16.msra.mxu0 %v1040
        %1063 = vmatprep.subr.bf16.mxu0 0
        %1064 = vmatpush1.bf16.msra.mxu0 %v1041
        %1065 = vmatprep.subr.bf16.mxu0 0
        %1066 = vmatpush1.bf16.msra.mxu0 %v1042
        %1067 = vmatprep.subr.bf16.mxu0 0
        %1068 = vmatpush1.bf16.msra.mxu0 0
        %1069 = vmatprep.subr.bf16.mxu0 0
        %1070 = vmatpush1.bf16.msra.mxu0 0
        %1071 = vmatprep.subr.bf16.mxu0 0
        %1072 = vmatpush1.bf16.msra.mxu0 0
        %1073 = vmatprep.subr.bf16.mxu0 0
        %1074 = vmatpush1.bf16.msra.mxu0 0
        %1075 = vmatprep.subr.bf16.mxu0 0
        %1076 = vmatpush1.bf16.msra.mxu0 0
        %1077 = vmatprep.subr.bf16.mxu0 0
        %1078 = vmatpush1.bf16.msra.mxu0 0
        %1079 = vmatprep.subr.bf16.mxu0 0
        %1080 = vmatpush1.bf16.msra.mxu0 0
        %1081 = vmatprep.subr.bf16.mxu0 0
        %1082 = vmatpush1.bf16.msra.mxu0 0
        %1083 = vmatprep.mubr.bf16.mxu0 0
        %1084 = vmatmul.mubr.bf16.gmra.mrb[0].mxu0 %v872
        %v1085 = vpop.f32.mrb[0].mxu0
        %v1086 = vadd.f32 %v998, %v1085
        %v1087 = vpop.f32.mrb[0].mxu0
        %v1088 = vpop.f32.mrb[0].mxu0
        %v1089 = vpop.f32.mrb[0].mxu0
        %1090 = vdwg.mxu0
        %s1091 = scalar_lea.vmem [#allocation6], 448
        %v1092 = vld [vmem:[%s1091] sm:$0xf]
        %v1093 = vld [vmem:[%s1091 + $0x4] sm:$0xf]
        %v1094 = vld [vmem:[%s1091 + $0x8] sm:$0xf]
        %v1095 = vld [vmem:[%s1091 + $0xc] sm:$0xf]
        %v1096 = vld [vmem:[%s1091 + $0x10] sm:$0xf]
        %v1097 = vld [vmem:[%s1091 + $0x14] sm:$0xf]
        %v1098 = vld [vmem:[%s1091 + $0x18] sm:$0xf]
        %v1099 = vld [vmem:[%s1091 + $0x1c] sm:$0xf]
        %v1100 = vld [vmem:[%s1091 + $0x20] sm:$0xf]
        %v1101 = vld [vmem:[%s1091 + $0x24] sm:$0xf]
        %v1102 = vld [vmem:[%s1091 + $0x28] sm:$0xf]
        %v1103 = vld [vmem:[%s1091 + $0x2c] sm:$0xf]
        %v1104 = vld [vmem:[%s1091 + $0x30] sm:$0xf]
        %v1105 = vld [vmem:[%s1091 + $0x34] sm:$0xf]
        %v1106 = vld [vmem:[%s1091 + $0x38] sm:$0xf]
        %v1107 = vld [vmem:[%s1091 + $0x3c] sm:$0xf]
        %v1109 = vrot.slane %v872, 1
        %v1127 = vunpack.c.l.b16 %v1092
        %v1128 = vunpack.c.l.b16 %v1093
        %v1129 = vunpack.c.l.b16 %v1094
        %v1130 = vunpack.c.l.b16 %v1095
        %v1131 = vunpack.c.l.b16 %v1096
        %v1132 = vunpack.c.l.b16 %v1097
        %v1133 = vunpack.c.l.b16 %v1098
        %v1134 = vunpack.c.l.b16 %v1099
        %v1135 = vunpack.c.l.b16 %v1100
        %v1136 = vunpack.c.l.b16 %v1101
        %v1137 = vunpack.c.l.b16 %v1102
        %v1138 = vunpack.c.l.b16 %v1103
        %v1139 = vunpack.c.l.b16 %v1104
        %v1140 = vunpack.c.l.b16 %v1105
        %v1141 = vunpack.c.l.b16 %v1106
        %v1142 = vunpack.c.l.b16 %v1107
        %v1143 = vpack.c.b16 %v1128, %v1127
        %v1144 = vpack.c.b16 %v1130, %v1129
        %v1145 = vpack.c.b16 %v1132, %v1131
        %v1146 = vpack.c.b16 %v1134, %v1133
        %v1147 = vpack.c.b16 %v1136, %v1135
        %v1148 = vpack.c.b16 %v1138, %v1137
        %v1149 = vpack.c.b16 %v1140, %v1139
        %v1150 = vpack.c.b16 %v1142, %v1141
        %1159 = vmatprep.subr.bf16.mxu0 0
        %1160 = vmatpush1.bf16.msra.mxu0 %v1143
        %1161 = vmatprep.subr.bf16.mxu0 0
        %1162 = vmatpush1.bf16.msra.mxu0 %v1144
        %1163 = vmatprep.subr.bf16.mxu0 0
        %1164 = vmatpush1.bf16.msra.mxu0 %v1145
        %1165 = vmatprep.subr.bf16.mxu0 0
        %1166 = vmatpush1.bf16.msra.mxu0 %v1146
        %1167 = vmatprep.subr.bf16.mxu0 0
        %1168 = vmatpush1.bf16.msra.mxu0 %v1147
        %1169 = vmatprep.subr.bf16.mxu0 0
        %1170 = vmatpush1.bf16.msra.mxu0 %v1148
        %1171 = vmatprep.subr.bf16.mxu0 0
        %1172 = vmatpush1.bf16.msra.mxu0 %v1149
        %1173 = vmatprep.subr.bf16.mxu0 0
        %1174 = vmatpush1.bf16.msra.mxu0 %v1150
        %1175 = vmatprep.subr.bf16.mxu0 0
        %1176 = vmatpush1.bf16.msra.mxu0 0
        %1177 = vmatprep.subr.bf16.mxu0 0
        %1178 = vmatpush1.bf16.msra.mxu0 0
        %1179 = vmatprep.subr.bf16.mxu0 0
        %1180 = vmatpush1.bf16.msra.mxu0 0
        %1181 = vmatprep.subr.bf16.mxu0 0
        %1182 = vmatpush1.bf16.msra.mxu0 0
        %1183 = vmatprep.subr.bf16.mxu0 0
        %1184 = vmatpush1.bf16.msra.mxu0 0
        %1185 = vmatprep.subr.bf16.mxu0 0
        %1186 = vmatpush1.bf16.msra.mxu0 0
        %1187 = vmatprep.subr.bf16.mxu0 0
        %1188 = vmatpush1.bf16.msra.mxu0 0
        %1189 = vmatprep.subr.bf16.mxu0 0
        %1190 = vmatpush1.bf16.msra.mxu0 0
        %1191 = vmatprep.mubr.bf16.mxu0 0
        %1192 = vmatmul.mubr.bf16.gmra.mrb[0].mxu0 %v1109
        %v1193 = vpop.f32.mrb[0].mxu0
        %v1194 = vadd.f32 0.0, %v1193
        %v1195 = vpop.f32.mrb[0].mxu0
        %v1196 = vpop.f32.mrb[0].mxu0
        %v1197 = vpop.f32.mrb[0].mxu0
        %1198 = vdwg.mxu0
        %v1199 = vadd.f32 %v1086, %v1194
        %s1200 = scalar_lea.vmem [#allocation6], 512
        %v1201 = vld [vmem:[%s1200] sm:$0xf]
        %v1202 = vld [vmem:[%s1200 + $0x4] sm:$0xf]
        %v1203 = vld [vmem:[%s1200 + $0x8] sm:$0xf]
        %v1204 = vld [vmem:[%s1200 + $0xc] sm:$0xf]
        %v1205 = vld [vmem:[%s1200 + $0x10] sm:$0xf]
        %v1206 = vld [vmem:[%s1200 + $0x14] sm:$0xf]
        %v1207 = vld [vmem:[%s1200 + $0x18] sm:$0xf]
        %v1208 = vld [vmem:[%s1200 + $0x1c] sm:$0xf]
        %v1209 = vld [vmem:[%s1200 + $0x20] sm:$0xf]
        %v1210 = vld [vmem:[%s1200 + $0x24] sm:$0xf]
        %v1211 = vld [vmem:[%s1200 + $0x28] sm:$0xf]
        %v1212 = vld [vmem:[%s1200 + $0x2c] sm:$0xf]
        %v1213 = vld [vmem:[%s1200 + $0x30] sm:$0xf]
        %v1214 = vld [vmem:[%s1200 + $0x34] sm:$0xf]
        %v1215 = vld [vmem:[%s1200 + $0x38] sm:$0xf]
        %v1216 = vld [vmem:[%s1200 + $0x3c] sm:$0xf]
        %v1217 = vrot.slane %v908, 1
        %v1218 = vrot.slane %v910, 2
        %v1219 = vor.u32 %v1217, %v1218
        %v1237 = vunpack.c.l.b16 %v1201
        %v1238 = vunpack.c.l.b16 %v1202
        %v1239 = vunpack.c.l.b16 %v1203
        %v1240 = vunpack.c.l.b16 %v1204
        %v1241 = vunpack.c.l.b16 %v1205
        %v1242 = vunpack.c.l.b16 %v1206
        %v1243 = vunpack.c.l.b16 %v1207
        %v1244 = vunpack.c.l.b16 %v1208
        %v1245 = vunpack.c.l.b16 %v1209
        %v1246 = vunpack.c.l.b16 %v1210
        %v1247 = vunpack.c.l.b16 %v1211
        %v1248 = vunpack.c.l.b16 %v1212
        %v1249 = vunpack.c.l.b16 %v1213
        %v1250 = vunpack.c.l.b16 %v1214
        %v1251 = vunpack.c.l.b16 %v1215
        %v1252 = vunpack.c.l.b16 %v1216
        %v1253 = vpack.c.b16 %v1238, %v1237
        %v1254 = vpack.c.b16 %v1240, %v1239
        %v1255 = vpack.c.b16 %v1242, %v1241
        %v1256 = vpack.c.b16 %v1244, %v1243
        %v1257 = vpack.c.b16 %v1246, %v1245
        %v1258 = vpack.c.b16 %v1248, %v1247
        %v1259 = vpack.c.b16 %v1250, %v1249
        %v1260 = vpack.c.b16 %v1252, %v1251
        %1269 = vmatprep.subr.bf16.mxu0 0
        %1270 = vmatpush1.bf16.msra.mxu0 %v1253
        %1271 = vmatprep.subr.bf16.mxu0 0
        %1272 = vmatpush1.bf16.msra.mxu0 %v1254
        %1273 = vmatprep.subr.bf16.mxu0 0
        %1274 = vmatpush1.bf16.msra.mxu0 %v1255
        %1275 = vmatprep.subr.bf16.mxu0 0
        %1276 = vmatpush1.bf16.msra.mxu0 %v1256
        %1277 = vmatprep.subr.bf16.mxu0 0
        %1278 = vmatpush1.bf16.msra.mxu0 %v1257
        %1279 = vmatprep.subr.bf16.mxu0 0
        %1280 = vmatpush1.bf16.msra.mxu0 %v1258
        %1281 = vmatprep.subr.bf16.mxu0 0
        %1282 = vmatpush1.bf16.msra.mxu0 %v1259
        %1283 = vmatprep.subr.bf16.mxu0 0
        %1284 = vmatpush1.bf16.msra.mxu0 %v1260
        %1285 = vmatprep.subr.bf16.mxu0 0
        %1286 = vmatpush1.bf16.msra.mxu0 0
        %1287 = vmatprep.subr.bf16.mxu0 0
        %1288 = vmatpush1.bf16.msra.mxu0 0
        %1289 = vmatprep.subr.bf16.mxu0 0
        %1290 = vmatpush1.bf16.msra.mxu0 0
        %1291 = vmatprep.subr.bf16.mxu0 0
        %1292 = vmatpush1.bf16.msra.mxu0 0
        %1293 = vmatprep.subr.bf16.mxu0 0
        %1294 = vmatpush1.bf16.msra.mxu0 0
        %1295 = vmatprep.subr.bf16.mxu0 0
        %1296 = vmatpush1.bf16.msra.mxu0 0
        %1297 = vmatprep.subr.bf16.mxu0 0
        %1298 = vmatpush1.bf16.msra.mxu0 0
        %1299 = vmatprep.subr.bf16.mxu0 0
        %1300 = vmatpush1.bf16.msra.mxu0 0
        %1301 = vmatprep.mubr.bf16.mxu0 0
        %1302 = vmatmul.mubr.bf16.gmra.mrb[0].mxu0 %v1219
        %v1303 = vpop.f32.mrb[0].mxu0
        %v1304 = vadd.f32 0.0, %v1303
        %v1305 = vpop.f32.mrb[0].mxu0
        %v1306 = vpop.f32.mrb[0].mxu0
        %v1307 = vpop.f32.mrb[0].mxu0
        %1308 = vdwg.mxu0
        %v1309 = vadd.f32 %v1199, %v1304
        %s1310 = scalar_lea.vmem [#allocation6], 576
        %v1311 = vld [vmem:[%s1310] sm:$0xf]
        %v1312 = vld [vmem:[%s1310 + $0x4] sm:$0xf]
        %v1313 = vld [vmem:[%s1310 + $0x8] sm:$0xf]
        %v1314 = vld [vmem:[%s1310 + $0xc] sm:$0xf]
        %v1315 = vld [vmem:[%s1310 + $0x10] sm:$0xf]
        %v1316 = vld [vmem:[%s1310 + $0x14] sm:$0xf]
        %v1317 = vld [vmem:[%s1310 + $0x18] sm:$0xf]
        %v1318 = vld [vmem:[%s1310 + $0x1c] sm:$0xf]
        %v1319 = vld [vmem:[%s1310 + $0x20] sm:$0xf]
        %v1320 = vld [vmem:[%s1310 + $0x24] sm:$0xf]
        %v1321 = vld [vmem:[%s1310 + $0x28] sm:$0xf]
        %v1322 = vld [vmem:[%s1310 + $0x2c] sm:$0xf]
        %v1323 = vld [vmem:[%s1310 + $0x30] sm:$0xf]
        %v1324 = vld [vmem:[%s1310 + $0x34] sm:$0xf]
        %v1325 = vld [vmem:[%s1310 + $0x38] sm:$0xf]
        %v1326 = vld [vmem:[%s1310 + $0x3c] sm:$0xf]
        %v1327 = vrot.slane %v872, 2
        %v1345 = vunpack.c.l.b16 %v1311
        %v1346 = vunpack.c.l.b16 %v1312
        %v1347 = vunpack.c.l.b16 %v1313
        %v1348 = vunpack.c.l.b16 %v1314
        %v1349 = vunpack.c.l.b16 %v1315
        %v1350 = vunpack.c.l.b16 %v1316
        %v1351 = vunpack.c.l.b16 %v1317
        %v1352 = vunpack.c.l.b16 %v1318
        %v1353 = vunpack.c.l.b16 %v1319
        %v1354 = vunpack.c.l.b16 %v1320
        %v1355 = vunpack.c.l.b16 %v1321
        %v1356 = vunpack.c.l.b16 %v1322
        %v1357 = vunpack.c.l.b16 %v1323
        %v1358 = vunpack.c.l.b16 %v1324
        %v1359 = vunpack.c.l.b16 %v1325
        %v1360 = vunpack.c.l.b16 %v1326
        %v1361 = vpack.c.b16 %v1346, %v1345
        %v1362 = vpack.c.b16 %v1348, %v1347
        %v1363 = vpack.c.b16 %v1350, %v1349
        %v1364 = vpack.c.b16 %v1352, %v1351
        %v1365 = vpack.c.b16 %v1354, %v1353
        %v1366 = vpack.c.b16 %v1356, %v1355
        %v1367 = vpack.c.b16 %v1358, %v1357
        %v1368 = vpack.c.b16 %v1360, %v1359
        %1377 = vmatprep.subr.bf16.mxu0 0
        %1378 = vmatpush1.bf16.msra.mxu0 %v1361
        %1379 = vmatprep.subr.bf16.mxu0 0
        %1380 = vmatpush1.bf16.msra.mxu0 %v1362
        %1381 = vmatprep.subr.bf16.mxu0 0
        %1382 = vmatpush1.bf16.msra.mxu0 %v1363
        %1383 = vmatprep.subr.bf16.mxu0 0
        %1384 = vmatpush1.bf16.msra.mxu0 %v1364
        %1385 = vmatprep.subr.bf16.mxu0 0
        %1386 = vmatpush1.bf16.msra.mxu0 %v1365
        %1387 = vmatprep.subr.bf16.mxu0 0
        %1388 = vmatpush1.bf16.msra.mxu0 %v1366
        %1389 = vmatprep.subr.bf16.mxu0 0
        %1390 = vmatpush1.bf16.msra.mxu0 %v1367
        %1391 = vmatprep.subr.bf16.mxu0 0
        %1392 = vmatpush1.bf16.msra.mxu0 %v1368
        %1393 = vmatprep.subr.bf16.mxu0 0
        %1394 = vmatpush1.bf16.msra.mxu0 0
        %1395 = vmatprep.subr.bf16.mxu0 0
        %1396 = vmatpush1.bf16.msra.mxu0 0
        %1397 = vmatprep.subr.bf16.mxu0 0
        %1398 = vmatpush1.bf16.msra.mxu0 0
        %1399 = vmatprep.subr.bf16.mxu0 0
        %1400 = vmatpush1.bf16.msra.mxu0 0
        %1401 = vmatprep.subr.bf16.mxu0 0
        %1402 = vmatpush1.bf16.msra.mxu0 0
        %1403 = vmatprep.subr.bf16.mxu0 0
        %1404 = vmatpush1.bf16.msra.mxu0 0
        %1405 = vmatprep.subr.bf16.mxu0 0
        %1406 = vmatpush1.bf16.msra.mxu0 0
        %1407 = vmatprep.subr.bf16.mxu0 0
        %1408 = vmatpush1.bf16.msra.mxu0 0
        %1409 = vmatprep.mubr.bf16.mxu0 0
        %1410 = vmatmul.mubr.bf16.gmra.mrb[0].mxu0 %v1327
        %v1411 = vpop.f32.mrb[0].mxu0
        %v1412 = vadd.f32 0.0, %v1411
        %v1413 = vpop.f32.mrb[0].mxu0
        %v1414 = vpop.f32.mrb[0].mxu0
        %v1415 = vpop.f32.mrb[0].mxu0
        %1416 = vdwg.mxu0
        %v1417 = vadd.f32 %v1309, %v1412
        %s1418 = scalar_lea.vmem %s2, 1
        %v1419 = vld [vmem:[%s1418] sm:$0x1]
        %v1421 = vlaneseq
        %v1422 = vshrl.u32 %v1421, 7
        %v1423 = vsub.s32 0, %v1422
        %v1424 = vrot.slane %v1419, %v1423
        %v1426 = vmul.f32 %v1417, %v1424
        %s1427 = scalar_lea.vmem %s3, 1
        %v1428 = vld [vmem:[%s1427] sm:$0x1]
        %v1430 = vlaneseq
        %v1431 = vshrl.u32 %v1430, 7
        %v1432 = vsub.s32 0, %v1431
        %v1433 = vrot.slane %v1428, %v1432
        %v1435 = vadd.f32 %v1426, %v1433
        %v1436 = vmax.f32 %v1435, 0.0
        %v1437 = vpack.c.bf16 %v1436, %v1436
        %v1439 = vrot.slane %v1437, 7
        %1441 = vst [vmem:[#allocation2] sm:$0x1e] %v1439
        %v1442 = vld [vmem:[#allocation2] sm:$0xff]
        %s1443 = scalar_lea.vmem [#allocation6], 640
        %v1444 = vld [vmem:[%s1443] sm:$0xf]
        %v1445 = vld [vmem:[%s1443 + $0x4] sm:$0xf]
        %v1446 = vld [vmem:[%s1443 + $0x8] sm:$0xf]
        %v1447 = vld [vmem:[%s1443 + $0xc] sm:$0xf]
        %v1448 = vld [vmem:[%s1443 + $0x10] sm:$0xf]
        %v1449 = vld [vmem:[%s1443 + $0x14] sm:$0xf]
        %v1450 = vld [vmem:[%s1443 + $0x18] sm:$0xf]
        %v1451 = vld [vmem:[%s1443 + $0x1c] sm:$0xf]
        %v1452 = vld [vmem:[%s1443 + $0x20] sm:$0xf]
        %v1453 = vld [vmem:[%s1443 + $0x24] sm:$0xf]
        %v1454 = vld [vmem:[%s1443 + $0x28] sm:$0xf]
        %v1455 = vld [vmem:[%s1443 + $0x2c] sm:$0xf]
        %v1456 = vld [vmem:[%s1443 + $0x30] sm:$0xf]
        %v1457 = vld [vmem:[%s1443 + $0x34] sm:$0xf]
        %v1458 = vld [vmem:[%s1443 + $0x38] sm:$0xf]
        %v1459 = vld [vmem:[%s1443 + $0x3c] sm:$0xf]
        %s1460 = scalar_lea.vmem [#allocation6], 704
        %v1461 = vld [vmem:[%s1460] sm:$0xf]
        %v1462 = vld [vmem:[%s1460 + $0x4] sm:$0xf]
        %v1463 = vld [vmem:[%s1460 + $0x8] sm:$0xf]
        %v1464 = vld [vmem:[%s1460 + $0xc] sm:$0xf]
        %v1465 = vld [vmem:[%s1460 + $0x10] sm:$0xf]
        %v1466 = vld [vmem:[%s1460 + $0x14] sm:$0xf]
        %v1467 = vld [vmem:[%s1460 + $0x18] sm:$0xf]
        %v1468 = vld [vmem:[%s1460 + $0x1c] sm:$0xf]
        %v1469 = vld [vmem:[%s1460 + $0x20] sm:$0xf]
        %v1470 = vld [vmem:[%s1460 + $0x24] sm:$0xf]
        %v1471 = vld [vmem:[%s1460 + $0x28] sm:$0xf]
        %v1472 = vld [vmem:[%s1460 + $0x2c] sm:$0xf]
        %v1473 = vld [vmem:[%s1460 + $0x30] sm:$0xf]
        %v1474 = vld [vmem:[%s1460 + $0x34] sm:$0xf]
        %v1475 = vld [vmem:[%s1460 + $0x38] sm:$0xf]
        %v1476 = vld [vmem:[%s1460 + $0x3c] sm:$0xf]
        %v1478 = vshrl.u32 %v1442, 16
        %v1480 = vshll.u32 %v1442, 16
        %v1482 = vrot.slane %v1480, 1
        %v1483 = vor.u32 %v1478, %v1482
        %v1501 = vunpack.c.l.b16 %v1461
        %v1502 = vunpack.c.l.b16 %v1462
        %v1503 = vunpack.c.l.b16 %v1463
        %v1504 = vunpack.c.l.b16 %v1464
        %v1505 = vunpack.c.l.b16 %v1465
        %v1506 = vunpack.c.l.b16 %v1466
        %v1507 = vunpack.c.l.b16 %v1467
        %v1508 = vunpack.c.l.b16 %v1468
        %v1509 = vunpack.c.l.b16 %v1469
        %v1510 = vunpack.c.l.b16 %v1470
        %v1511 = vunpack.c.l.b16 %v1471
        %v1512 = vunpack.c.l.b16 %v1472
        %v1513 = vunpack.c.l.b16 %v1473
        %v1514 = vunpack.c.l.b16 %v1474
        %v1515 = vunpack.c.l.b16 %v1475
        %v1516 = vunpack.c.l.b16 %v1476
        %v1517 = vpack.c.b16 %v1502, %v1501
        %v1518 = vpack.c.b16 %v1504, %v1503
        %v1519 = vpack.c.b16 %v1506, %v1505
        %v1520 = vpack.c.b16 %v1508, %v1507
        %v1521 = vpack.c.b16 %v1510, %v1509
        %v1522 = vpack.c.b16 %v1512, %v1511
        %v1523 = vpack.c.b16 %v1514, %v1513
        %v1524 = vpack.c.b16 %v1516, %v1515
        %1533 = vmatprep.subr.bf16.mxu0 0
        %1534 = vmatpush1.bf16.msra.mxu0 %v1517
        %1535 = vmatprep.subr.bf16.mxu0 0
        %1536 = vmatpush1.bf16.msra.mxu0 %v1518
        %1537 = vmatprep.subr.bf16.mxu0 0
        %1538 = vmatpush1.bf16.msra.mxu0 %v1519
        %1539 = vmatprep.subr.bf16.mxu0 0
        %1540 = vmatpush1.bf16.msra.mxu0 %v1520
        %1541 = vmatprep.subr.bf16.mxu0 0
        %1542 = vmatpush1.bf16.msra.mxu0 %v1521
        %1543 = vmatprep.subr.bf16.mxu0 0
        %1544 = vmatpush1.bf16.msra.mxu0 %v1522
        %1545 = vmatprep.subr.bf16.mxu0 0
        %1546 = vmatpush1.bf16.msra.mxu0 %v1523
        %1547 = vmatprep.subr.bf16.mxu0 0
        %1548 = vmatpush1.bf16.msra.mxu0 %v1524
        %1549 = vmatprep.subr.bf16.mxu0 0
        %1550 = vmatpush1.bf16.msra.mxu0 0
        %1551 = vmatprep.subr.bf16.mxu0 0
        %1552 = vmatpush1.bf16.msra.mxu0 0
        %1553 = vmatprep.subr.bf16.mxu0 0
        %1554 = vmatpush1.bf16.msra.mxu0 0
        %1555 = vmatprep.subr.bf16.mxu0 0
        %1556 = vmatpush1.bf16.msra.mxu0 0
        %1557 = vmatprep.subr.bf16.mxu0 0
        %1558 = vmatpush1.bf16.msra.mxu0 0
        %1559 = vmatprep.subr.bf16.mxu0 0
        %1560 = vmatpush1.bf16.msra.mxu0 0
        %1561 = vmatprep.subr.bf16.mxu0 0
        %1562 = vmatpush1.bf16.msra.mxu0 0
        %1563 = vmatprep.subr.bf16.mxu0 0
        %1564 = vmatpush1.bf16.msra.mxu0 0
        %1565 = vmatprep.mubr.bf16.mxu0 0
        %1566 = vmatmul.mubr.bf16.gmra.mrb[0].mxu0 %v1483
        %v1567 = vpop.f32.mrb[0].mxu0
        %v1568 = vadd.f32 0.0, %v1567
        %v1569 = vpop.f32.mrb[0].mxu0
        %v1570 = vpop.f32.mrb[0].mxu0
        %v1571 = vpop.f32.mrb[0].mxu0
        %1572 = vdwg.mxu0
        %v1589 = vunpack.c.l.b16 %v1444
        %v1590 = vunpack.c.l.b16 %v1445
        %v1591 = vunpack.c.l.b16 %v1446
        %v1592 = vunpack.c.l.b16 %v1447
        %v1593 = vunpack.c.l.b16 %v1448
        %v1594 = vunpack.c.l.b16 %v1449
        %v1595 = vunpack.c.l.b16 %v1450
        %v1596 = vunpack.c.l.b16 %v1451
        %v1597 = vunpack.c.l.b16 %v1452
        %v1598 = vunpack.c.l.b16 %v1453
        %v1599 = vunpack.c.l.b16 %v1454
        %v1600 = vunpack.c.l.b16 %v1455
        %v1601 = vunpack.c.l.b16 %v1456
        %v1602 = vunpack.c.l.b16 %v1457
        %v1603 = vunpack.c.l.b16 %v1458
        %v1604 = vunpack.c.l.b16 %v1459
        %v1605 = vpack.c.b16 %v1590, %v1589
        %v1606 = vpack.c.b16 %v1592, %v1591
        %v1607 = vpack.c.b16 %v1594, %v1593
        %v1608 = vpack.c.b16 %v1596, %v1595
        %v1609 = vpack.c.b16 %v1598, %v1597
        %v1610 = vpack.c.b16 %v1600, %v1599
        %v1611 = vpack.c.b16 %v1602, %v1601
        %v1612 = vpack.c.b16 %v1604, %v1603
        %1621 = vmatprep.subr.bf16.mxu0 0
        %1622 = vmatpush1.bf16.msra.mxu0 %v1605
        %1623 = vmatprep.subr.bf16.mxu0 0
        %1624 = vmatpush1.bf16.msra.mxu0 %v1606
        %1625 = vmatprep.subr.bf16.mxu0 0
        %1626 = vmatpush1.bf16.msra.mxu0 %v1607
        %1627 = vmatprep.subr.bf16.mxu0 0
        %1628 = vmatpush1.bf16.msra.mxu0 %v1608
        %1629 = vmatprep.subr.bf16.mxu0 0
        %1630 = vmatpush1.bf16.msra.mxu0 %v1609
        %1631 = vmatprep.subr.bf16.mxu0 0
        %1632 = vmatpush1.bf16.msra.mxu0 %v1610
        %1633 = vmatprep.subr.bf16.mxu0 0
        %1634 = vmatpush1.bf16.msra.mxu0 %v1611
        %1635 = vmatprep.subr.bf16.mxu0 0
        %1636 = vmatpush1.bf16.msra.mxu0 %v1612
        %1637 = vmatprep.subr.bf16.mxu0 0
        %1638 = vmatpush1.bf16.msra.mxu0 0
        %1639 = vmatprep.subr.bf16.mxu0 0
        %1640 = vmatpush1.bf16.msra.mxu0 0
        %1641 = vmatprep.subr.bf16.mxu0 0
        %1642 = vmatpush1.bf16.msra.mxu0 0
        %1643 = vmatprep.subr.bf16.mxu0 0
        %1644 = vmatpush1.bf16.msra.mxu0 0
        %1645 = vmatprep.subr.bf16.mxu0 0
        %1646 = vmatpush1.bf16.msra.mxu0 0
        %1647 = vmatprep.subr.bf16.mxu0 0
        %1648 = vmatpush1.bf16.msra.mxu0 0
        %1649 = vmatprep.subr.bf16.mxu0 0
        %1650 = vmatpush1.bf16.msra.mxu0 0
        %1651 = vmatprep.subr.bf16.mxu0 0
        %1652 = vmatpush1.bf16.msra.mxu0 0
        %1653 = vmatprep.mubr.bf16.mxu0 0
        %1654 = vmatmul.mubr.bf16.gmra.mrb[0].mxu0 %v1442
        %v1655 = vpop.f32.mrb[0].mxu0
        %v1656 = vadd.f32 %v1568, %v1655
        %v1657 = vpop.f32.mrb[0].mxu0
        %v1658 = vpop.f32.mrb[0].mxu0
        %v1659 = vpop.f32.mrb[0].mxu0
        %1660 = vdwg.mxu0
        %s1661 = scalar_lea.vmem [#allocation6], 768
        %v1662 = vld [vmem:[%s1661] sm:$0xf]
        %v1663 = vld [vmem:[%s1661 + $0x4] sm:$0xf]
        %v1664 = vld [vmem:[%s1661 + $0x8] sm:$0xf]
        %v1665 = vld [vmem:[%s1661 + $0xc] sm:$0xf]
        %v1666 = vld [vmem:[%s1661 + $0x10] sm:$0xf]
        %v1667 = vld [vmem:[%s1661 + $0x14] sm:$0xf]
        %v1668 = vld [vmem:[%s1661 + $0x18] sm:$0xf]
        %v1669 = vld [vmem:[%s1661 + $0x1c] sm:$0xf]
        %v1670 = vld [vmem:[%s1661 + $0x20] sm:$0xf]
        %v1671 = vld [vmem:[%s1661 + $0x24] sm:$0xf]
        %v1672 = vld [vmem:[%s1661 + $0x28] sm:$0xf]
        %v1673 = vld [vmem:[%s1661 + $0x2c] sm:$0xf]
        %v1674 = vld [vmem:[%s1661 + $0x30] sm:$0xf]
        %v1675 = vld [vmem:[%s1661 + $0x34] sm:$0xf]
        %v1676 = vld [vmem:[%s1661 + $0x38] sm:$0xf]
        %v1677 = vld [vmem:[%s1661 + $0x3c] sm:$0xf]
        %v1679 = vrot.slane %v1442, 1
        %v1697 = vunpack.c.l.b16 %v1662
        %v1698 = vunpack.c.l.b16 %v1663
        %v1699 = vunpack.c.l.b16 %v1664
        %v1700 = vunpack.c.l.b16 %v1665
        %v1701 = vunpack.c.l.b16 %v1666
        %v1702 = vunpack.c.l.b16 %v1667
        %v1703 = vunpack.c.l.b16 %v1668
        %v1704 = vunpack.c.l.b16 %v1669
        %v1705 = vunpack.c.l.b16 %v1670
        %v1706 = vunpack.c.l.b16 %v1671
        %v1707 = vunpack.c.l.b16 %v1672
        %v1708 = vunpack.c.l.b16 %v1673
        %v1709 = vunpack.c.l.b16 %v1674
        %v1710 = vunpack.c.l.b16 %v1675
        %v1711 = vunpack.c.l.b16 %v1676
        %v1712 = vunpack.c.l.b16 %v1677
        %v1713 = vpack.c.b16 %v1698, %v1697
        %v1714 = vpack.c.b16 %v1700, %v1699
        %v1715 = vpack.c.b16 %v1702, %v1701
        %v1716 = vpack.c.b16 %v1704, %v1703
        %v1717 = vpack.c.b16 %v1706, %v1705
        %v1718 = vpack.c.b16 %v1708, %v1707
        %v1719 = vpack.c.b16 %v1710, %v1709
        %v1720 = vpack.c.b16 %v1712, %v1711
        %1729 = vmatprep.subr.bf16.mxu0 0
        %1730 = vmatpush1.bf16.msra.mxu0 %v1713
        %1731 = vmatprep.subr.bf16.mxu0 0
        %1732 = vmatpush1.bf16.msra.mxu0 %v1714
        %1733 = vmatprep.subr.bf16.mxu0 0
        %1734 = vmatpush1.bf16.msra.mxu0 %v1715
        %1735 = vmatprep.subr.bf16.mxu0 0
        %1736 = vmatpush1.bf16.msra.mxu0 %v1716
        %1737 = vmatprep.subr.bf16.mxu0 0
        %1738 = vmatpush1.bf16.msra.mxu0 %v1717
        %1739 = vmatprep.subr.bf16.mxu0 0
        %1740 = vmatpush1.bf16.msra.mxu0 %v1718
        %1741 = vmatprep.subr.bf16.mxu0 0
        %1742 = vmatpush1.bf16.msra.mxu0 %v1719
        %1743 = vmatprep.subr.bf16.mxu0 0
        %1744 = vmatpush1.bf16.msra.mxu0 %v1720
        %1745 = vmatprep.subr.bf16.mxu0 0
        %1746 = vmatpush1.bf16.msra.mxu0 0
        %1747 = vmatprep.subr.bf16.mxu0 0
        %1748 = vmatpush1.bf16.msra.mxu0 0
        %1749 = vmatprep.subr.bf16.mxu0 0
        %1750 = vmatpush1.bf16.msra.mxu0 0
        %1751 = vmatprep.subr.bf16.mxu0 0
        %1752 = vmatpush1.bf16.msra.mxu0 0
        %1753 = vmatprep.subr.bf16.mxu0 0
        %1754 = vmatpush1.bf16.msra.mxu0 0
        %1755 = vmatprep.subr.bf16.mxu0 0
        %1756 = vmatpush1.bf16.msra.mxu0 0
        %1757 = vmatprep.subr.bf16.mxu0 0
        %1758 = vmatpush1.bf16.msra.mxu0 0
        %1759 = vmatprep.subr.bf16.mxu0 0
        %1760 = vmatpush1.bf16.msra.mxu0 0
        %1761 = vmatprep.mubr.bf16.mxu0 0
        %1762 = vmatmul.mubr.bf16.gmra.mrb[0].mxu0 %v1679
        %v1763 = vpop.f32.mrb[0].mxu0
        %v1764 = vadd.f32 0.0, %v1763
        %v1765 = vpop.f32.mrb[0].mxu0
        %v1766 = vpop.f32.mrb[0].mxu0
        %v1767 = vpop.f32.mrb[0].mxu0
        %1768 = vdwg.mxu0
        %v1769 = vadd.f32 %v1656, %v1764
        %s1770 = scalar_lea.vmem [#allocation6], 832
        %v1771 = vld [vmem:[%s1770] sm:$0xf]
        %v1772 = vld [vmem:[%s1770 + $0x4] sm:$0xf]
        %v1773 = vld [vmem:[%s1770 + $0x8] sm:$0xf]
        %v1774 = vld [vmem:[%s1770 + $0xc] sm:$0xf]
        %v1775 = vld [vmem:[%s1770 + $0x10] sm:$0xf]
        %v1776 = vld [vmem:[%s1770 + $0x14] sm:$0xf]
        %v1777 = vld [vmem:[%s1770 + $0x18] sm:$0xf]
        %v1778 = vld [vmem:[%s1770 + $0x1c] sm:$0xf]
        %v1779 = vld [vmem:[%s1770 + $0x20] sm:$0xf]
        %v1780 = vld [vmem:[%s1770 + $0x24] sm:$0xf]
        %v1781 = vld [vmem:[%s1770 + $0x28] sm:$0xf]
        %v1782 = vld [vmem:[%s1770 + $0x2c] sm:$0xf]
        %v1783 = vld [vmem:[%s1770 + $0x30] sm:$0xf]
        %v1784 = vld [vmem:[%s1770 + $0x34] sm:$0xf]
        %v1785 = vld [vmem:[%s1770 + $0x38] sm:$0xf]
        %v1786 = vld [vmem:[%s1770 + $0x3c] sm:$0xf]
        %v1787 = vrot.slane %v1478, 1
        %v1788 = vrot.slane %v1480, 2
        %v1789 = vor.u32 %v1787, %v1788
        %v1807 = vunpack.c.l.b16 %v1771
        %v1808 = vunpack.c.l.b16 %v1772
        %v1809 = vunpack.c.l.b16 %v1773
        %v1810 = vunpack.c.l.b16 %v1774
        %v1811 = vunpack.c.l.b16 %v1775
        %v1812 = vunpack.c.l.b16 %v1776
        %v1813 = vunpack.c.l.b16 %v1777
        %v1814 = vunpack.c.l.b16 %v1778
        %v1815 = vunpack.c.l.b16 %v1779
        %v1816 = vunpack.c.l.b16 %v1780
        %v1817 = vunpack.c.l.b16 %v1781
        %v1818 = vunpack.c.l.b16 %v1782
        %v1819 = vunpack.c.l.b16 %v1783
        %v1820 = vunpack.c.l.b16 %v1784
        %v1821 = vunpack.c.l.b16 %v1785
        %v1822 = vunpack.c.l.b16 %v1786
        %v1823 = vpack.c.b16 %v1808, %v1807
        %v1824 = vpack.c.b16 %v1810, %v1809
        %v1825 = vpack.c.b16 %v1812, %v1811
        %v1826 = vpack.c.b16 %v1814, %v1813
        %v1827 = vpack.c.b16 %v1816, %v1815
        %v1828 = vpack.c.b16 %v1818, %v1817
        %v1829 = vpack.c.b16 %v1820, %v1819
        %v1830 = vpack.c.b16 %v1822, %v1821
        %1839 = vmatprep.subr.bf16.mxu0 0
        %1840 = vmatpush1.bf16.msra.mxu0 %v1823
        %1841 = vmatprep.subr.bf16.mxu0 0
        %1842 = vmatpush1.bf16.msra.mxu0 %v1824
        %1843 = vmatprep.subr.bf16.mxu0 0
        %1844 = vmatpush1.bf16.msra.mxu0 %v1825
        %1845 = vmatprep.subr.bf16.mxu0 0
        %1846 = vmatpush1.bf16.msra.mxu0 %v1826
        %1847 = vmatprep.subr.bf16.mxu0 0
        %1848 = vmatpush1.bf16.msra.mxu0 %v1827
        %1849 = vmatprep.subr.bf16.mxu0 0
        %1850 = vmatpush1.bf16.msra.mxu0 %v1828
        %1851 = vmatprep.subr.bf16.mxu0 0
        %1852 = vmatpush1.bf16.msra.mxu0 %v1829
        %1853 = vmatprep.subr.bf16.mxu0 0
        %1854 = vmatpush1.bf16.msra.mxu0 %v1830
        %1855 = vmatprep.subr.bf16.mxu0 0
        %1856 = vmatpush1.bf16.msra.mxu0 0
        %1857 = vmatprep.subr.bf16.mxu0 0
        %1858 = vmatpush1.bf16.msra.mxu0 0
        %1859 = vmatprep.subr.bf16.mxu0 0
        %1860 = vmatpush1.bf16.msra.mxu0 0
        %1861 = vmatprep.subr.bf16.mxu0 0
        %1862 = vmatpush1.bf16.msra.mxu0 0
        %1863 = vmatprep.subr.bf16.mxu0 0
        %1864 = vmatpush1.bf16.msra.mxu0 0
        %1865 = vmatprep.subr.bf16.mxu0 0
        %1866 = vmatpush1.bf16.msra.mxu0 0
        %1867 = vmatprep.subr.bf16.mxu0 0
        %1868 = vmatpush1.bf16.msra.mxu0 0
        %1869 = vmatprep.subr.bf16.mxu0 0
        %1870 = vmatpush1.bf16.msra.mxu0 0
        %1871 = vmatprep.mubr.bf16.mxu0 0
        %1872 = vmatmul.mubr.bf16.gmra.mrb[0].mxu0 %v1789
        %v1873 = vpop.f32.mrb[0].mxu0
        %v1874 = vadd.f32 0.0, %v1873
        %v1875 = vpop.f32.mrb[0].mxu0
        %v1876 = vpop.f32.mrb[0].mxu0
        %v1877 = vpop.f32.mrb[0].mxu0
        %1878 = vdwg.mxu0
        %v1879 = vadd.f32 %v1769, %v1874
        %s1880 = scalar_lea.vmem [#allocation6], 896
        %v1881 = vld [vmem:[%s1880] sm:$0xf]
        %v1882 = vld [vmem:[%s1880 + $0x4] sm:$0xf]
        %v1883 = vld [vmem:[%s1880 + $0x8] sm:$0xf]
        %v1884 = vld [vmem:[%s1880 + $0xc] sm:$0xf]
        %v1885 = vld [vmem:[%s1880 + $0x10] sm:$0xf]
        %v1886 = vld [vmem:[%s1880 + $0x14] sm:$0xf]
        %v1887 = vld [vmem:[%s1880 + $0x18] sm:$0xf]
        %v1888 = vld [vmem:[%s1880 + $0x1c] sm:$0xf]
        %v1889 = vld [vmem:[%s1880 + $0x20] sm:$0xf]
        %v1890 = vld [vmem:[%s1880 + $0x24] sm:$0xf]
        %v1891 = vld [vmem:[%s1880 + $0x28] sm:$0xf]
        %v1892 = vld [vmem:[%s1880 + $0x2c] sm:$0xf]
        %v1893 = vld [vmem:[%s1880 + $0x30] sm:$0xf]
        %v1894 = vld [vmem:[%s1880 + $0x34] sm:$0xf]
        %v1895 = vld [vmem:[%s1880 + $0x38] sm:$0xf]
        %v1896 = vld [vmem:[%s1880 + $0x3c] sm:$0xf]
        %v1897 = vrot.slane %v1442, 2
        %v1915 = vunpack.c.l.b16 %v1881
        %v1916 = vunpack.c.l.b16 %v1882
        %v1917 = vunpack.c.l.b16 %v1883
        %v1918 = vunpack.c.l.b16 %v1884
        %v1919 = vunpack.c.l.b16 %v1885
        %v1920 = vunpack.c.l.b16 %v1886
        %v1921 = vunpack.c.l.b16 %v1887
        %v1922 = vunpack.c.l.b16 %v1888
        %v1923 = vunpack.c.l.b16 %v1889
        %v1924 = vunpack.c.l.b16 %v1890
        %v1925 = vunpack.c.l.b16 %v1891
        %v1926 = vunpack.c.l.b16 %v1892
        %v1927 = vunpack.c.l.b16 %v1893
        %v1928 = vunpack.c.l.b16 %v1894
        %v1929 = vunpack.c.l.b16 %v1895
        %v1930 = vunpack.c.l.b16 %v1896
        %v1931 = vpack.c.b16 %v1916, %v1915
        %v1932 = vpack.c.b16 %v1918, %v1917
        %v1933 = vpack.c.b16 %v1920, %v1919
        %v1934 = vpack.c.b16 %v1922, %v1921
        %v1935 = vpack.c.b16 %v1924, %v1923
        %v1936 = vpack.c.b16 %v1926, %v1925
        %v1937 = vpack.c.b16 %v1928, %v1927
        %v1938 = vpack.c.b16 %v1930, %v1929
        %1947 = vmatprep.subr.bf16.mxu0 0
        %1948 = vmatpush1.bf16.msra.mxu0 %v1931
        %1949 = vmatprep.subr.bf16.mxu0 0
        %1950 = vmatpush1.bf16.msra.mxu0 %v1932
        %1951 = vmatprep.subr.bf16.mxu0 0
        %1952 = vmatpush1.bf16.msra.mxu0 %v1933
        %1953 = vmatprep.subr.bf16.mxu0 0
        %1954 = vmatpush1.bf16.msra.mxu0 %v1934
        %1955 = vmatprep.subr.bf16.mxu0 0
        %1956 = vmatpush1.bf16.msra.mxu0 %v1935
        %1957 = vmatprep.subr.bf16.mxu0 0
        %1958 = vmatpush1.bf16.msra.mxu0 %v1936
        %1959 = vmatprep.subr.bf16.mxu0 0
        %1960 = vmatpush1.bf16.msra.mxu0 %v1937
        %1961 = vmatprep.subr.bf16.mxu0 0
        %1962 = vmatpush1.bf16.msra.mxu0 %v1938
        %1963 = vmatprep.subr.bf16.mxu0 0
        %1964 = vmatpush1.bf16.msra.mxu0 0
        %1965 = vmatprep.subr.bf16.mxu0 0
        %1966 = vmatpush1.bf16.msra.mxu0 0
        %1967 = vmatprep.subr.bf16.mxu0 0
        %1968 = vmatpush1.bf16.msra.mxu0 0
        %1969 = vmatprep.subr.bf16.mxu0 0
        %1970 = vmatpush1.bf16.msra.mxu0 0
        %1971 = vmatprep.subr.bf16.mxu0 0
        %1972 = vmatpush1.bf16.msra.mxu0 0
        %1973 = vmatprep.subr.bf16.mxu0 0
        %1974 = vmatpush1.bf16.msra.mxu0 0
        %1975 = vmatprep.subr.bf16.mxu0 0
        %1976 = vmatpush1.bf16.msra.mxu0 0
        %1977 = vmatprep.subr.bf16.mxu0 0
        %1978 = vmatpush1.bf16.msra.mxu0 0
        %1979 = vmatprep.mubr.bf16.mxu0 0
        %1980 = vmatmul.mubr.bf16.gmra.mrb[0].mxu0 %v1897
        %v1981 = vpop.f32.mrb[0].mxu0
        %v1982 = vadd.f32 0.0, %v1981
        %v1983 = vpop.f32.mrb[0].mxu0
        %v1984 = vpop.f32.mrb[0].mxu0
        %v1985 = vpop.f32.mrb[0].mxu0
        %1986 = vdwg.mxu0
        %v1987 = vadd.f32 %v1879, %v1982
        %s1988 = scalar_lea.vmem %s2, 2
        %v1989 = vld [vmem:[%s1988] sm:$0x1]
        %v1991 = vlaneseq
        %v1992 = vshrl.u32 %v1991, 7
        %v1993 = vsub.s32 0, %v1992
        %v1994 = vrot.slane %v1989, %v1993
        %v1996 = vmul.f32 %v1987, %v1994
        %s1997 = scalar_lea.vmem %s3, 2
        %v1998 = vld [vmem:[%s1997] sm:$0x1]
        %v2000 = vlaneseq
        %v2001 = vshrl.u32 %v2000, 7
        %v2002 = vsub.s32 0, %v2001
        %v2003 = vrot.slane %v1998, %v2002
        %v2005 = vadd.f32 %v1996, %v2003
        %v2006 = vmax.f32 %v2005, 0.0
        %v2007 = vpack.c.bf16 %v2006, %v2006
        %v2009 = vrot.slane %v2007, 7
        %2011 = vst [vmem:[#allocation2] sm:$0x1e] %v2009
        %v2012 = vld [vmem:[#allocation2] sm:$0x1e]
        %v2013 = vld [vmem:[#allocation8] sm:$0xf]
        %v2014 = vld [vmem:[#allocation8 + $0x4] sm:$0xf]
        %v2015 = vld [vmem:[#allocation8 + $0x8] sm:$0xf]
        %v2016 = vld [vmem:[#allocation8 + $0xc] sm:$0xf]
        %v2017 = vld [vmem:[#allocation8 + $0x10] sm:$0xf]
        %v2018 = vld [vmem:[#allocation8 + $0x14] sm:$0xf]
        %v2019 = vld [vmem:[#allocation8 + $0x18] sm:$0xf]
        %v2020 = vld [vmem:[#allocation8 + $0x1c] sm:$0xf]
        %v2021 = vld [vmem:[#allocation8 + $0x20] sm:$0xf]
        %v2022 = vld [vmem:[#allocation8 + $0x24] sm:$0xf]
        %v2023 = vld [vmem:[#allocation8 + $0x28] sm:$0xf]
        %v2024 = vld [vmem:[#allocation8 + $0x2c] sm:$0xf]
        %v2025 = vld [vmem:[#allocation8 + $0x30] sm:$0xf]
        %v2026 = vld [vmem:[#allocation8 + $0x34] sm:$0xf]
        %v2027 = vld [vmem:[#allocation8 + $0x38] sm:$0xf]
        %v2028 = vld [vmem:[#allocation8 + $0x3c] sm:$0xf]
        %v2029 = vld [vmem:[%s5] sm:$0x1]
        %v2031 = vlaneseq
        %v2032 = vshrl.u32 %v2031, 7
        %v2033 = vsub.s32 0, %v2032
        %v2034 = vrot.slane %v2029, %v2033
        %v2037 = vrot.slane %v2012, 1
        %v2055 = vunpack.c.l.b16 %v2013
        %v2056 = vunpack.c.l.b16 %v2014
        %v2057 = vunpack.c.l.b16 %v2015
        %v2058 = vunpack.c.l.b16 %v2016
        %v2059 = vunpack.c.l.b16 %v2017
        %v2060 = vunpack.c.l.b16 %v2018
        %v2061 = vunpack.c.l.b16 %v2019
        %v2062 = vunpack.c.l.b16 %v2020
        %v2063 = vunpack.c.l.b16 %v2021
        %v2064 = vunpack.c.l.b16 %v2022
        %v2065 = vunpack.c.l.b16 %v2023
        %v2066 = vunpack.c.l.b16 %v2024
        %v2067 = vunpack.c.l.b16 %v2025
        %v2068 = vunpack.c.l.b16 %v2026
        %v2069 = vunpack.c.l.b16 %v2027
        %v2070 = vunpack.c.l.b16 %v2028
        %v2071 = vpack.c.b16 %v2056, %v2055
        %v2072 = vpack.c.b16 %v2058, %v2057
        %v2073 = vpack.c.b16 %v2060, %v2059
        %v2074 = vpack.c.b16 %v2062, %v2061
        %v2075 = vpack.c.b16 %v2064, %v2063
        %v2076 = vpack.c.b16 %v2066, %v2065
        %v2077 = vpack.c.b16 %v2068, %v2067
        %v2078 = vpack.c.b16 %v2070, %v2069
        %2087 = vmatprep.subr.bf16.mxu0 0
        %2088 = vmatpush1.bf16.msra.mxu0 %v2071
        %2089 = vmatprep.subr.bf16.mxu0 0
        %2090 = vmatpush1.bf16.msra.mxu0 %v2072
        %2091 = vmatprep.subr.bf16.mxu0 0
        %2092 = vmatpush1.bf16.msra.mxu0 %v2073
        %2093 = vmatprep.subr.bf16.mxu0 0
        %2094 = vmatpush1.bf16.msra.mxu0 %v2074
        %2095 = vmatprep.subr.bf16.mxu0 0
        %2096 = vmatpush1.bf16.msra.mxu0 %v2075
        %2097 = vmatprep.subr.bf16.mxu0 0
        %2098 = vmatpush1.bf16.msra.mxu0 %v2076
        %2099 = vmatprep.subr.bf16.mxu0 0
        %2100 = vmatpush1.bf16.msra.mxu0 %v2077
        %2101 = vmatprep.subr.bf16.mxu0 0
        %2102 = vmatpush1.bf16.msra.mxu0 %v2078
        %2103 = vmatprep.subr.bf16.mxu0 0
        %2104 = vmatpush1.bf16.msra.mxu0 0
        %2105 = vmatprep.subr.bf16.mxu0 0
        %2106 = vmatpush1.bf16.msra.mxu0 0
        %2107 = vmatprep.subr.bf16.mxu0 0
        %2108 = vmatpush1.bf16.msra.mxu0 0
        %2109 = vmatprep.subr.bf16.mxu0 0
        %2110 = vmatpush1.bf16.msra.mxu0 0
        %2111 = vmatprep.subr.bf16.mxu0 0
        %2112 = vmatpush1.bf16.msra.mxu0 0
        %2113 = vmatprep.subr.bf16.mxu0 0
        %2114 = vmatpush1.bf16.msra.mxu0 0
        %2115 = vmatprep.subr.bf16.mxu0 0
        %2116 = vmatpush1.bf16.msra.mxu0 0
        %2117 = vmatprep.subr.bf16.mxu0 0
        %2118 = vmatpush1.bf16.msra.mxu0 0
        %2119 = vmatprep.mubr.bf16.mxu0 0
        %2120 = vmatmul.mubr.bf16.gmra.mrb[0].mxu0 %v2037
        %v2121 = vpop.f32.mrb[0].mxu0
        %v2122 = vadd.f32 %v2034, %v2121
        %v2123 = vpop.f32.mrb[0].mxu0
        %v2124 = vpop.f32.mrb[0].mxu0
        %v2125 = vpop.f32.mrb[0].mxu0
        %2126 = vdwg.mxu0
        %v2127 = vmax.f32 %v2122, 0.0
        %2128 = vst [vmem:[%s295] sm:$0xff] %v2127
        %s2129 = sand.u32 %s163, 1
        %s2130 = scalar_lea.sflag [#allocation5], %s2129
        %s2131 = sand.u32 %s163, 1
        %s2132 = smul.addr %s2131, 8
        %s2133 = scalar_lea.vmem [#allocation9], %s2132
        // Predicated region
        $region57: #{tpu_custom_call.1} parent=43 // pred_check
          %p2134 = pneg %p173
        $region58: #{tpu_custom_call.1} parent=43 // pred_check_branch
          %2136 = sbr.rel (%p2134) target = $region60
        $region59: #{tpu_custom_call.1} parent=43 // pred_region
          %s2138 = ssub.s32 128, 128
          %2139 = vsyncadd %s2130, %s2138
          %s2140 = smul.addr %s24, 128
          %s2141 = scalar_lea.hbm %s6, %s2140
          %s2143 = sshll.u32 %s2133, 4
          %s2144 = int_to_ptr.vmem [resolvable:$true] %s2143
          %2146 = dma.vmem_to_hbm [thread:$0]  %s2144, 128, %s2141, %s2130
        $region60: #{tpu_custom_call.1} parent=43 // pred_fallthru
          _
      $region44: #{tpu_custom_call.1} parent=5 // pred_fallthru
        _
      %p2147 = scmp.le.s32.totalorder 2, %s19
      // Predicated region
      $region61: #{tpu_custom_call.1} parent=5 // pred_check
        %p2148 = pneg %p2147
      $region62: #{tpu_custom_call.1} parent=5 // pred_check_branch
        %2150 = sbr.rel (%p2148) target = $region64
      $region63: #{tpu_custom_call.1} parent=5 // pred_region
        %s2151 = ssub.s32 %s19, 2
        // Predicated region
        $region65: #{tpu_custom_call.1} parent=63 // pred_check
          %p2152 = pneg %p179
        $region66: #{tpu_custom_call.1} parent=63 // pred_check_branch
          %2154 = sbr.rel (%p2152) target = $region68
        $region67: #{tpu_custom_call.1} parent=63 // pred_region
          %s2155 = sand.u32 %s164, 1
          %s2156 = scalar_lea.sflag [#allocation5], %s2155
          %s2157 = sand.u32 %s164, 1
          %s2158 = smul.addr %s2157, 8
          %s2159 = scalar_lea.vmem [#allocation9], %s2158
          %2160 = dma.done %s2156, 128
        $region68: #{tpu_custom_call.1} parent=63 // pred_fallthru
          _
      $region64: #{tpu_custom_call.1} parent=5 // pred_fallthru
        _
    $region6: #{tpu_custom_call.1} parent=1 // loop_footer
      %s23 = sadd.s32 1, %s19
    $region7: #{tpu_custom_call.1} parent=1 // loop_footer_branch
      %18 = sbr.rel target = $region3
    $region8: #{tpu_custom_call.1} parent=1 // loop_exit
      _
    %2161 = vsyncpa [#allocation4], 1
    %s2162 = scalar_lea.sflag [#allocation4], 1
    %2163 = vsyncpa %s2162, 1
    %2164 = vsyncpa [#allocation7], 1
    %2165 = vsyncpa [#allocation5], 1
    %s2166 = scalar_lea.sflag [#allocation5], 1
    %2167 = vsyncpa %s2166, 1

</llo_original>
